<compile_context>
chip_gen: v5e
topology: v5e:2x2
jax: 0.10.0
libtpu: 0.0.40
codegen_flags: <defaults>
</compile_context>

<pallas_src>
import functools

import jax
import jax.numpy as jnp
import numpy as np
from jax.experimental import pallas as pl
from jax.experimental.pallas import tpu as pltpu

_NEG_BIG = -1e30  # large negative instead of -inf so padding can never NaN


def _round_up(x, m):
    return (x + m - 1) // m * m


def _vmem_capacity_bytes():
    """Physical VMEM of the local chip; conservative v7x default on failure."""
    try:
        return int(pltpu.get_tpu_info().vmem_capacity_bytes)
    except Exception:
        return 64 * 1024 * 1024


def _conv_pool_classify(emb2, tb, L, max_fs, t0,
                        w_ref, b_ref, valid_ref, wl_ref, bl_ref, out_ref):
    """Shared tail: fused conv taps + time max + bias/ReLU + linear head.

    emb2:      (tb*L, E_pad) bf16 activations (lane-dense)
    w_ref:     (max_fs, E_pad, NF_pad) bf16   b_ref:  (1, NF_pad) f32
    valid_ref: (L, NF_pad) f32 in {0,1}       wl_ref: (NF_pad, C_pad) bf16
    bl_ref:    (1, C_pad) f32                 out_ref:(tb, C_pad) f32
    """
    nf = w_ref.shape[-1]

    # Tap k contributes emb[t+k] @ w[k] at output time t.  Each tap is one
    # lane-dense bf16 matmul; its f32 MXU output is rotated back along time
    # with a native 32-bit sublane roll (XLU slot, not VALU), avoiding packed
    # bf16 sublane shifts and any f32 input copy.  Wrap-around rows land only
    # on time positions invalid for every filter group using that tap; those
    # are removed by the validity select below.
    acc = jnp.dot(emb2, w_ref[0], preferred_element_type=jnp.float32)
    acc = acc.reshape(tb, L, nf)
    for k in range(1, max_fs):                       # static, unrolled
        y = jnp.dot(emb2, w_ref[k], preferred_element_type=jnp.float32)
        acc = acc + pltpu.roll(y.reshape(tb, L, nf), shift=L - k, axis=1)

    # Max over time.  Rows [0, t0) are valid for every filter size (t0 is
    # 8-aligned), so only the short tail needs the per-group validity select.
    valid = valid_ref[...]                           # (L, nf) in {0, 1}
    if max_fs == 1:
        pooled = jnp.max(acc, axis=1)
    elif t0 > 0:
        head = jnp.max(acc[:, :t0, :], axis=1)
        tail = jnp.max(jnp.where(valid[t0:, :][None, :, :] > 0.5,
                                 acc[:, t0:, :], _NEG_BIG), axis=1)
        pooled = jnp.maximum(head, tail)
    else:
        pooled = jnp.max(jnp.where(valid[None, :, :] > 0.5, acc, _NEG_BIG),
                         axis=1)

    # conv bias + ReLU after the max (exact: bias is time-invariant, ReLU
    # monotone); matches the torch op order (relu after conv, max afterwards).
    pooled = jnp.maximum(pooled + b_ref[...], 0.0)

    logits = jnp.dot(pooled.astype(wl_ref.dtype), wl_ref[...],
                     preferred_element_type=jnp.float32)
    out_ref[...] = (logits + bl_ref[...]).astype(out_ref.dtype)


def _cnn_kernel_fused_gather(max_fs, t0, ids_ref, table_ref, w_ref, b_ref,
                             valid_ref, wl_ref, bl_ref, out_ref):
    """Small-vocab path: embedding gather fused in-kernel (one-hot matmul)."""
    tb, L, _ = ids_ref.shape                         # (tb, L, 1) int32
    vocab_pad = table_ref.shape[0]
    iota_v = jax.lax.broadcasted_iota(jnp.int32, (tb, L, vocab_pad), 2)
    onehot = (ids_ref[...] == iota_v).astype(jnp.bfloat16)      # (tb, L, V)
    emb2 = jnp.dot(onehot.reshape(tb * L, vocab_pad), table_ref[...],
                   preferred_element_type=jnp.float32).astype(jnp.bfloat16)
    _conv_pool_classify(emb2, tb, L, max_fs, t0,
                        w_ref, b_ref, valid_ref, wl_ref, bl_ref, out_ref)


def _cnn_kernel_pregathered(max_fs, t0, emb_ref, w_ref, b_ref, valid_ref,
                            wl_ref, bl_ref, out_ref):
    """Large-vocab fallback: embeddings gathered (bf16, lane-padded) outside."""
    tb, L, e_pad = emb_ref.shape
    emb2 = emb_ref[...].reshape(tb * L, e_pad)
    _conv_pool_classify(emb2, tb, L, max_fs, t0,
                        w_ref, b_ref, valid_ref, wl_ref, bl_ref, out_ref)


def _pick_tile_b(batch, L, e_pad, nf_pad, c_pad, vocab_pad, max_fs,
                 gather_in_kernel, budget_bytes):
    """Largest batch tile (multiple of 8) whose lane-padded working set fits."""
    resident = (max_fs * e_pad * nf_pad * 2        # fused conv weight (bf16)
                + L * nf_pad * 4                   # validity mask (f32)
                + nf_pad * c_pad * 2               # labeler weight (bf16)
                + (nf_pad + c_pad) * 4)            # biases (f32)
    if gather_in_kernel:
        resident += vocab_pad * e_pad * 2          # VMEM-resident table (bf16)
    per_row = (2 * L * nf_pad * 4                  # running acc + per-tap y (f32)
               + 2 * c_pad * 4)                    # output double-buffer (f32)
    if gather_in_kernel:
        per_row += (2 * _round_up(L, 8) * 128 * 4  # ids (L,1) block, dbl-buffered
                    + L * vocab_pad * 2            # one-hot (bf16)
                    + L * e_pad * 6)               # gathered emb f32 + bf16 copy
    else:
        per_row += 3 * L * e_pad * 2               # emb bf16 dbl-buffer + copy
    avail = max(budget_bytes - resident, 8 * per_row)
    tile = max(8, (avail // per_row) // 8 * 8)
    b8 = _round_up(batch, 8)
    tile = min(tile, b8)
    # Keep >= 2 grid steps when the batch allows it: restores DMA/compute
    # overlap and lets the batch axis split across v7x's two TensorCores.
    if b8 >= 16:
        tile = min(tile, _round_up(b8 // 2, 8))
    return tile


def cnn_classifier_forward(token_ids, params, *, filter_sizes, num_filters,
                           num_classes):
    filter_sizes = tuple(filter_sizes)
    max_fs = max(filter_sizes)
    B, L = token_ids.shape
    V, E = params["embedding"].shape
    if L < max_fs:
        raise ValueError(f"seq_len={L} must be >= max filter size {max_fs}")

    F = num_filters
    nf = len(filter_sizes) * F
    nf_pad = _round_up(nf, 128)
    c_pad = _round_up(num_classes, 128)
    e_pad = _round_up(E, 128)
    vocab_pad = _round_up(V, 128)

    # In-kernel one-hot gather only while the table is small enough to keep
    # VMEM-resident and the one-hot matmul stays cheap.
    gather_in_kernel = (vocab_pad <= 1024) and (vocab_pad * e_pad * 2 <= 2 << 20)

    # ---- fused, lane-dense (bf16) weights ----------------------------------
    w_all = jnp.zeros((max_fs, e_pad, nf_pad), jnp.float32)
    b_all = jnp.zeros((1, nf_pad), jnp.float32)
    valid = jnp.ones((L, nf_pad), jnp.float32)       # padded channels: all valid
    t_idx = jnp.arange(L, dtype=jnp.int32)[:, None]
    for i, fs in enumerate(filter_sizes):
        sl = slice(i * F, (i + 1) * F)
        w_all = w_all.at[:fs, :E, sl].set(params[f"conv{i}_w"])
        b_all = b_all.at[0, sl].set(params[f"conv{i}_b"])
        valid = valid.at[:, sl].set(
            jnp.broadcast_to((t_idx < (L - fs + 1)).astype(jnp.float32), (L, F)))
    w_all = w_all.astype(jnp.bfloat16)
    wl = (jnp.zeros((nf_pad, c_pad), jnp.float32)
          .at[:nf, :num_classes].set(params["labeler_w"]).astype(jnp.bfloat16))
    bl = (jnp.zeros((1, c_pad), jnp.float32)
          .at[0, :num_classes].set(params["labeler_b"]))
    table_bf = (jnp.zeros((vocab_pad, e_pad), jnp.float32)
                .at[:V, :E].set(params["embedding"]).astype(jnp.bfloat16))

    # ---- generation-aware VMEM budget & batch tiling ------------------------
    vmem_cap = _vmem_capacity_bytes()                 # 64 MiB v7x, 128 MiB v5e/v6e
    vmem_limit = min(vmem_cap * 5 // 8, 96 * 1024 * 1024)
    tile_b = _pick_tile_b(B, L, e_pad, nf_pad, c_pad, vocab_pad, max_fs,
                          gather_in_kernel, vmem_limit // 2)
    b_pad = _round_up(_round_up(B, 8), tile_b)
    grid = (b_pad // tile_b,)
    t0 = max(0, ((L - max_fs + 1) // 8) * 8)          # 8-aligned always-valid rows

    ids2 = jnp.pad(token_ids.astype(jnp.int32), ((0, b_pad - B), (0, 0)))

    common_specs = [
        pl.BlockSpec((max_fs, e_pad, nf_pad), lambda b: (0, 0, 0)),  # conv w
        pl.BlockSpec((1, nf_pad), lambda b: (0, 0)),                 # conv bias
        pl.BlockSpec((L, nf_pad), lambda b: (0, 0)),                 # validity
        pl.BlockSpec((nf_pad, c_pad), lambda b: (0, 0)),             # labeler w
        pl.BlockSpec((1, c_pad), lambda b: (0, 0)),                  # labeler b
    ]

    if gather_in_kernel:
        kernel = functools.partial(_cnn_kernel_fused_gather, max_fs, t0)
        ids = ids2[:, :, None]                        # (b_pad, L, 1) int32
        in_specs = [pl.BlockSpec((tile_b, L, 1), lambda b: (b, 0, 0)),
                    pl.BlockSpec((vocab_pad, e_pad), lambda b: (0, 0)),
                    ] + common_specs
        inputs = (ids, table_bf, w_all, b_all, valid, wl, bl)
        gather_bytes = ids.size * 4 + table_bf.size * 2
        gather_flops = 2 * B * L * vocab_pad * e_pad
    else:
        kernel = functools.partial(_cnn_kernel_pregathered, max_fs, t0)
        emb = jnp.take(table_bf, ids2, axis=0)        # (b_pad, L, e_pad) bf16
        in_specs = [pl.BlockSpec((tile_b, L, e_pad), lambda b: (b, 0, 0)),
                    ] + common_specs
        inputs = (emb, w_all, b_all, valid, wl, bl)
        gather_bytes = emb.size * 2
        gather_flops = 0

    flops = (2 * B * sum((L - fs + 1) * fs * E * F for fs in filter_sizes)
             + 2 * B * nf * num_classes + gather_flops)
    bytes_accessed = int(gather_bytes + w_all.size * 2 + wl.size * 2
                         + valid.size * 4 + b_pad * c_pad * 4)

    out = pl.pallas_call(
        kernel,
        out_shape=jax.ShapeDtypeStruct((b_pad, c_pad), jnp.float32),
        grid_spec=pltpu.PrefetchScalarGridSpec(
            num_scalar_prefetch=0,
            grid=grid,
            in_specs=in_specs,
            out_specs=pl.BlockSpec((tile_b, c_pad), lambda b: (b, 0)),
        ),
        compiler_params=pltpu.CompilerParams(
            # TODO(synk): try pltpu.CORE_PARALLEL on the batch axis for v7x
            #             once its behaviour on single-core chips is verified.
            dimension_semantics=("parallel",),
            vmem_limit_bytes=vmem_limit,
        ),
        cost_estimate=pl.CostEstimate(
            flops=flops, transcendentals=0, bytes_accessed=bytes_accessed),
    )(*inputs)

    return out[:B, :num_classes]


def _reference_forward(token_ids, params, *, filter_sizes, num_filters,
                       num_classes):
    """Plain-JAX reference with the same bf16 weight/activation quantization."""
    emb = jnp.take(params["embedding"], token_ids, axis=0).astype(jnp.bfloat16)
    B, L, _ = emb.shape
    codes = []
    for i, fs in enumerate(filter_sizes):
        w = params[f"conv{i}_w"].astype(jnp.bfloat16)          # (fs, E, F)
        L_out = L - fs + 1
        acc = jnp.zeros((B, L_out, num_filters), jnp.float32)
        for k in range(fs):
            acc = acc + jnp.einsum("ble,ef->blf", emb[:, k:k + L_out, :], w[k],
                                   preferred_element_type=jnp.float32)
        acc = acc + params[f"conv{i}_b"].reshape(1, 1, num_filters)
        codes.append(jnp.maximum(jnp.max(acc, axis=1), 0.0))
    code = jnp.concatenate(codes, axis=1)
    wl = params["labeler_w"].astype(jnp.bfloat16)
    logits = jnp.dot(code.astype(jnp.bfloat16), wl,
                     preferred_element_type=jnp.float32)
    return logits + params["labeler_b"].reshape(1, num_classes)


def init_params(key, *, vocab_size, num_classes, embed_size, num_filters,
                filter_sizes):
    """Deterministic synthetic parameters (shapes match the torch module)."""
    keys = jax.random.split(key, 2 + 2 * len(filter_sizes) + 2)
    params = {}
    params["embedding"] = (
        jax.random.normal(keys[0], (vocab_size, embed_size), jnp.float32) * 0.1)
    for i, fs in enumerate(filter_sizes):
        # torch Conv1d weight is (F, E, fs); stored here as (fs, E, F).
        params[f"conv{i}_w"] = (
            jax.random.normal(keys[1 + 2 * i], (fs, embed_size, num_filters),
                              jnp.float32) * 0.1)
        params[f"conv{i}_b"] = (
            jax.random.normal(keys[2 + 2 * i], (num_filters,), jnp.float32)
            * 0.1)
    code_size = len(filter_sizes) * num_filters
    # torch Linear weight is (C, code_size); stored here as (code_size, C).
    params["labeler_w"] = (
        jax.random.normal(keys[-2], (code_size, num_classes), jnp.float32)
        * 0.1)
    params["labeler_b"] = (
        jax.random.normal(keys[-1], (num_classes,), jnp.float32) * 0.1)
    return params


if __name__ == "__main__":
    vocab_size = 50
    num_classes = 4
    embed_size = 32
    num_filters = 8
    filter_sizes = (3, 4, 5)
    batch = 2
    seq_len = 16

    key = jax.random.PRNGKey(0)
    k_tok, k_param = jax.random.split(key)

    params = init_params(
        k_param,
        vocab_size=vocab_size,
        num_classes=num_classes,
        embed_size=embed_size,
        num_filters=num_filters,
        filter_sizes=filter_sizes,
    )
    token_ids = jax.random.randint(k_tok, (batch, seq_len), 0, vocab_size,
                                   dtype=jnp.int32)

    logits = cnn_classifier_forward(
        token_ids,
        params,
        filter_sizes=filter_sizes,
        num_filters=num_filters,
        num_classes=num_classes,
    )
    jax.block_until_ready(logits)
    assert logits.shape == (batch, num_classes)

    ref = _reference_forward(
        token_ids,
        params,
        filter_sizes=filter_sizes,
        num_filters=num_filters,
        num_classes=num_classes,
    )
    np.testing.assert_allclose(np.asarray(logits), np.asarray(ref),
                               atol=1e-2, rtol=1e-2)
    print("KERNEL_OK")
</pallas_src>

<mosaic_0001>
module attributes {stable_mosaic.version = 11 : i64} {
  func.func @_cnn_kernel_fused_gather(%arg0: i32, %arg1: memref<8x16x1xi32, #tpu.memory_space<vmem>>, %arg2: memref<128x128xbf16, #tpu.memory_space<vmem>>, %arg3: memref<5x128x128xbf16, #tpu.memory_space<vmem>>, %arg4: memref<1x128xf32, #tpu.memory_space<vmem>>, %arg5: memref<16x128xf32, #tpu.memory_space<vmem>>, %arg6: memref<128x128xbf16, #tpu.memory_space<vmem>>, %arg7: memref<1x128xf32, #tpu.memory_space<vmem>>, %arg8: memref<8x128xf32, #tpu.memory_space<vmem>>) attributes {dimension_semantics = [#tpu.dimension_semantics<parallel>], iteration_bounds = array<i64: 1>, scalar_prefetch = 0 : i64, scratch_operands = 0 : i64, tpu.core_type = #tpu.core_type<tc>, window_params = [{transform_indices = @transform_0, window_bounds = array<i64: 8, 16, 1>}, {pipeline_mode = #tpu.pipeline_mode<synchronous>, transform_indices = @transform_1, window_bounds = array<i64: 128, 128>}, {pipeline_mode = #tpu.pipeline_mode<synchronous>, transform_indices = @transform_2, window_bounds = array<i64: 5, 128, 128>}, {pipeline_mode = #tpu.pipeline_mode<synchronous>, transform_indices = @transform_3, window_bounds = array<i64: 1, 128>}, {pipeline_mode = #tpu.pipeline_mode<synchronous>, transform_indices = @transform_4, window_bounds = array<i64: 16, 128>}, {pipeline_mode = #tpu.pipeline_mode<synchronous>, transform_indices = @transform_5, window_bounds = array<i64: 128, 128>}, {pipeline_mode = #tpu.pipeline_mode<synchronous>, transform_indices = @transform_6, window_bounds = array<i64: 1, 128>}, {transform_indices = @transform_7, window_bounds = array<i64: 8, 128>}]} {
    %0 = tpu.iota {dimensions = array<i32: 2>} : vector<8x16x128xi32>
    %c0 = arith.constant 0 : index
    %c0_0 = arith.constant 0 : index
    %c0_1 = arith.constant 0 : index
    %1 = vector.load %arg1[%c0, %c0_0, %c0_1] : memref<8x16x1xi32, #tpu.memory_space<vmem>>, vector<8x16x1xi32>
    %2 = vector.broadcast %1 : vector<8x16x1xi32> to vector<8x16x128xi32>
    %3 = arith.cmpi eq, %2, %0 : vector<8x16x128xi32>
    %4 = arith.extui %3 : vector<8x16x128xi1> to vector<8x16x128xi32>
    %5 = arith.sitofp %4 : vector<8x16x128xi32> to vector<8x16x128xf32>
    %6 = arith.truncf %5 : vector<8x16x128xf32> to vector<8x16x128xbf16>
    %7 = vector.shape_cast %6 : vector<8x16x128xbf16> to vector<128x128xbf16>
    %c0_2 = arith.constant 0 : index
    %c0_3 = arith.constant 0 : index
    %8 = vector.load %arg2[%c0_2, %c0_3] : memref<128x128xbf16, #tpu.memory_space<vmem>>, vector<128x128xbf16>
    %cst = arith.constant dense<0.000000e+00> : vector<128x128xf32>
    %9 = tpu.matmul %7, %8, %cst {dimension_numbers = #tpu.dot_dimension_numbers<[1], [0], [0], [1], [0, 0, 1, 1], [], []>} : vector<128x128xbf16>, vector<128x128xbf16>, vector<128x128xf32> -> vector<128x128xf32>
    %10 = arith.truncf %9 : vector<128x128xf32> to vector<128x128xbf16>
    %c0_4 = arith.constant 0 : index
    %c0_5 = arith.constant 0 : index
    %c0_6 = arith.constant 0 : index
    %11 = vector.load %arg3[%c0_4, %c0_5, %c0_6] : memref<5x128x128xbf16, #tpu.memory_space<vmem>>, vector<1x128x128xbf16>
    %12 = vector.shape_cast %11 : vector<1x128x128xbf16> to vector<128x128xbf16>
    %cst_7 = arith.constant dense<0.000000e+00> : vector<128x128xf32>
    %13 = tpu.matmul %10, %12, %cst_7 {dimension_numbers = #tpu.dot_dimension_numbers<[1], [0], [0], [1], [0, 0, 1, 1], [], []>} : vector<128x128xbf16>, vector<128x128xbf16>, vector<128x128xf32> -> vector<128x128xf32>
    %14 = vector.shape_cast %13 : vector<128x128xf32> to vector<8x16x128xf32>
    %c1 = arith.constant 1 : index
    %c0_8 = arith.constant 0 : index
    %c0_9 = arith.constant 0 : index
    %15 = vector.load %arg3[%c1, %c0_8, %c0_9] : memref<5x128x128xbf16, #tpu.memory_space<vmem>>, vector<1x128x128xbf16>
    %16 = vector.shape_cast %15 : vector<1x128x128xbf16> to vector<128x128xbf16>
    %cst_10 = arith.constant dense<0.000000e+00> : vector<128x128xf32>
    %17 = tpu.matmul %10, %16, %cst_10 {dimension_numbers = #tpu.dot_dimension_numbers<[1], [0], [0], [1], [0, 0, 1, 1], [], []>} : vector<128x128xbf16>, vector<128x128xbf16>, vector<128x128xf32> -> vector<128x128xf32>
    %18 = vector.shape_cast %17 : vector<128x128xf32> to vector<8x16x128xf32>
    %c15_i32 = arith.constant 15 : i32
    %19 = tpu.dynamic_rotate %18 by %c15_i32 dim 1 : vector<8x16x128xf32>, i32 -> vector<8x16x128xf32>
    %20 = arith.addf %14, %19 : vector<8x16x128xf32>
    %c2 = arith.constant 2 : index
    %c0_11 = arith.constant 0 : index
    %c0_12 = arith.constant 0 : index
    %21 = vector.load %arg3[%c2, %c0_11, %c0_12] : memref<5x128x128xbf16, #tpu.memory_space<vmem>>, vector<1x128x128xbf16>
    %22 = vector.shape_cast %21 : vector<1x128x128xbf16> to vector<128x128xbf16>
    %cst_13 = arith.constant dense<0.000000e+00> : vector<128x128xf32>
    %23 = tpu.matmul %10, %22, %cst_13 {dimension_numbers = #tpu.dot_dimension_numbers<[1], [0], [0], [1], [0, 0, 1, 1], [], []>} : vector<128x128xbf16>, vector<128x128xbf16>, vector<128x128xf32> -> vector<128x128xf32>
    %24 = vector.shape_cast %23 : vector<128x128xf32> to vector<8x16x128xf32>
    %c14_i32 = arith.constant 14 : i32
    %25 = tpu.dynamic_rotate %24 by %c14_i32 dim 1 : vector<8x16x128xf32>, i32 -> vector<8x16x128xf32>
    %26 = arith.addf %20, %25 : vector<8x16x128xf32>
    %c3 = arith.constant 3 : index
    %c0_14 = arith.constant 0 : index
    %c0_15 = arith.constant 0 : index
    %27 = vector.load %arg3[%c3, %c0_14, %c0_15] : memref<5x128x128xbf16, #tpu.memory_space<vmem>>, vector<1x128x128xbf16>
    %28 = vector.shape_cast %27 : vector<1x128x128xbf16> to vector<128x128xbf16>
    %cst_16 = arith.constant dense<0.000000e+00> : vector<128x128xf32>
    %29 = tpu.matmul %10, %28, %cst_16 {dimension_numbers = #tpu.dot_dimension_numbers<[1], [0], [0], [1], [0, 0, 1, 1], [], []>} : vector<128x128xbf16>, vector<128x128xbf16>, vector<128x128xf32> -> vector<128x128xf32>
    %30 = vector.shape_cast %29 : vector<128x128xf32> to vector<8x16x128xf32>
    %c13_i32 = arith.constant 13 : i32
    %31 = tpu.dynamic_rotate %30 by %c13_i32 dim 1 : vector<8x16x128xf32>, i32 -> vector<8x16x128xf32>
    %32 = arith.addf %26, %31 : vector<8x16x128xf32>
    %c4 = arith.constant 4 : index
    %c0_17 = arith.constant 0 : index
    %c0_18 = arith.constant 0 : index
    %33 = vector.load %arg3[%c4, %c0_17, %c0_18] : memref<5x128x128xbf16, #tpu.memory_space<vmem>>, vector<1x128x128xbf16>
    %34 = vector.shape_cast %33 : vector<1x128x128xbf16> to vector<128x128xbf16>
    %cst_19 = arith.constant dense<0.000000e+00> : vector<128x128xf32>
    %35 = tpu.matmul %10, %34, %cst_19 {dimension_numbers = #tpu.dot_dimension_numbers<[1], [0], [0], [1], [0, 0, 1, 1], [], []>} : vector<128x128xbf16>, vector<128x128xbf16>, vector<128x128xf32> -> vector<128x128xf32>
    %36 = vector.shape_cast %35 : vector<128x128xf32> to vector<8x16x128xf32>
    %c12_i32 = arith.constant 12 : i32
    %37 = tpu.dynamic_rotate %36 by %c12_i32 dim 1 : vector<8x16x128xf32>, i32 -> vector<8x16x128xf32>
    %38 = arith.addf %32, %37 : vector<8x16x128xf32>
    %c0_20 = arith.constant 0 : index
    %c0_21 = arith.constant 0 : index
    %39 = vector.load %arg5[%c0_20, %c0_21] : memref<16x128xf32, #tpu.memory_space<vmem>>, vector<16x128xf32>
    %40 = vector.extract_strided_slice %38 {offsets = [0, 0, 0], sizes = [8, 8, 128], strides = [1, 1, 1]} : vector<8x16x128xf32> to vector<8x8x128xf32>
    %cst_22 = arith.constant dense<0xFF800000> : vector<8x128xf32>
    %41 = vector.multi_reduction <maximumf>, %40, %cst_22 [1] : vector<8x8x128xf32> to vector<8x128xf32>
    %42 = vector.extract_strided_slice %39 {offsets = [8, 0], sizes = [8, 128], strides = [1, 1]} : vector<16x128xf32> to vector<8x128xf32>
    %43 = vector.shape_cast %42 : vector<8x128xf32> to vector<1x8x128xf32>
    %cst_23 = arith.constant 5.000000e-01 : f32
    %44 = vector.broadcast %cst_23 : f32 to vector<1x8x128xf32>
    %45 = arith.cmpf ogt, %43, %44 : vector<1x8x128xf32>
    %46 = vector.extract_strided_slice %38 {offsets = [0, 8, 0], sizes = [8, 8, 128], strides = [1, 1, 1]} : vector<8x16x128xf32> to vector<8x8x128xf32>
    %cst_24 = arith.constant -1.000000e+30 : f32
    %47 = vector.shape_cast %45 : vector<1x8x128xi1> to vector<1x8x128xi1>
    %48 = vector.broadcast %47 : vector<1x8x128xi1> to vector<8x8x128xi1>
    %49 = vector.broadcast %cst_24 : f32 to vector<8x8x128xf32>
    %50 = arith.select %48, %46, %49 : vector<8x8x128xi1>, vector<8x8x128xf32>
    %cst_25 = arith.constant dense<0xFF800000> : vector<8x128xf32>
    %51 = vector.multi_reduction <maximumf>, %50, %cst_25 [1] : vector<8x8x128xf32> to vector<8x128xf32>
    %52 = arith.maximumf %41, %51 : vector<8x128xf32>
    %c0_26 = arith.constant 0 : index
    %c0_27 = arith.constant 0 : index
    %53 = vector.load %arg4[%c0_26, %c0_27] : memref<1x128xf32, #tpu.memory_space<vmem>>, vector<1x128xf32>
    %54 = vector.broadcast %53 : vector<1x128xf32> to vector<8x128xf32>
    %55 = arith.addf %52, %54 : vector<8x128xf32>
    %cst_28 = arith.constant 0.000000e+00 : f32
    %56 = vector.broadcast %cst_28 : f32 to vector<8x128xf32>
    %57 = arith.maximumf %55, %56 : vector<8x128xf32>
    %58 = arith.truncf %57 : vector<8x128xf32> to vector<8x128xbf16>
    %c0_29 = arith.constant 0 : index
    %c0_30 = arith.constant 0 : index
    %59 = vector.load %arg6[%c0_29, %c0_30] : memref<128x128xbf16, #tpu.memory_space<vmem>>, vector<128x128xbf16>
    %cst_31 = arith.constant dense<0.000000e+00> : vector<8x128xf32>
    %60 = tpu.matmul %58, %59, %cst_31 {dimension_numbers = #tpu.dot_dimension_numbers<[1], [0], [0], [1], [0, 0, 1, 1], [], []>} : vector<8x128xbf16>, vector<128x128xbf16>, vector<8x128xf32> -> vector<8x128xf32>
    %c0_32 = arith.constant 0 : index
    %c0_33 = arith.constant 0 : index
    %61 = vector.load %arg7[%c0_32, %c0_33] : memref<1x128xf32, #tpu.memory_space<vmem>>, vector<1x128xf32>
    %62 = vector.broadcast %61 : vector<1x128xf32> to vector<8x128xf32>
    %63 = arith.addf %60, %62 : vector<8x128xf32>
    %c0_34 = arith.constant 0 : index
    %c0_35 = arith.constant 0 : index
    %64 = vector.load %arg8[%c0_34, %c0_35] : memref<8x128xf32, #tpu.memory_space<vmem>>, vector<8x128xf32>
    tpu.vector_store %arg8[%c0_34, %c0_35], %63 {strides = array<i32>} : memref<8x128xf32, #tpu.memory_space<vmem>>, vector<8x128xf32>,
    return
  }
  func.func @transform_0(%arg0: i32) -> (i32, i32, i32) {
    %c0_i32 = arith.constant 0 : i32
    %c0_i32_0 = arith.constant 0 : i32
    %c0_i32_1 = arith.constant 0 : i32
    return %arg0, %c0_i32, %c0_i32_0 : i32, i32, i32
  }
  func.func @transform_1(%arg0: i32) -> (i32, i32) {
    %c0_i32 = arith.constant 0 : i32
    %c0_i32_0 = arith.constant 0 : i32
    %c0_i32_1 = arith.constant 0 : i32
    return %c0_i32, %c0_i32_0 : i32, i32
  }
  func.func @transform_2(%arg0: i32) -> (i32, i32, i32) {
    %c0_i32 = arith.constant 0 : i32
    %c0_i32_0 = arith.constant 0 : i32
    %c0_i32_1 = arith.constant 0 : i32
    %c0_i32_2 = arith.constant 0 : i32
    return %c0_i32, %c0_i32_0, %c0_i32_1 : i32, i32, i32
  }
  func.func @transform_3(%arg0: i32) -> (i32, i32) {
    %c0_i32 = arith.constant 0 : i32
    %c0_i32_0 = arith.constant 0 : i32
    %c0_i32_1 = arith.constant 0 : i32
    return %c0_i32, %c0_i32_0 : i32, i32
  }
  func.func @transform_4(%arg0: i32) -> (i32, i32) {
    %c0_i32 = arith.constant 0 : i32
    %c0_i32_0 = arith.constant 0 : i32
    %c0_i32_1 = arith.constant 0 : i32
    return %c0_i32, %c0_i32_0 : i32, i32
  }
  func.func @transform_5(%arg0: i32) -> (i32, i32) {
    %c0_i32 = arith.constant 0 : i32
    %c0_i32_0 = arith.constant 0 : i32
    %c0_i32_1 = arith.constant 0 : i32
    return %c0_i32, %c0_i32_0 : i32, i32
  }
  func.func @transform_6(%arg0: i32) -> (i32, i32) {
    %c0_i32 = arith.constant 0 : i32
    %c0_i32_0 = arith.constant 0 : i32
    %c0_i32_1 = arith.constant 0 : i32
    return %c0_i32, %c0_i32_0 : i32, i32
  }
  func.func @transform_7(%arg0: i32) -> (i32, i32) {
    %c0_i32 = arith.constant 0 : i32
    %c0_i32_0 = arith.constant 0 : i32
    return %arg0, %c0_i32 : i32, i32
  }
}

</mosaic_0001>

<llo_original>
// kernel: tpu_custom_call.1
$region0: #{tpu_custom_call.1}
  #allocation0 [shape = 'u32[]', space=smem, size = 0x4, offset = 0x4, fixed_abs, tag = 'smem constant byte address 0x4 - core index']
  #allocation1 [shape = 'u32[72,128]{1,0:T(1,128)}', space=vmem, size = 0x9000, scoped, tag = 'internal scratch']
  %s0 = inlined_call_operand.vmem [shape: s32[8,16,1], index: 0, kind: input, shape index: {}]
  %s1 = inlined_call_operand.vmem [shape: bf16[128,128], index: 1, kind: input, shape index: {}]
  %s2 = inlined_call_operand.hbm [shape: bf16[5,128,128], index: 2, kind: input, shape index: {}]
  %s3 = inlined_call_operand.vmem [shape: f32[1,128], index: 3, kind: input, shape index: {}]
  %s4 = inlined_call_operand.hbm [shape: f32[16,128], index: 4, kind: input, shape index: {}]
  %s5 = inlined_call_operand.vmem [shape: bf16[128,128], index: 5, kind: input, shape index: {}]
  %s6 = inlined_call_operand.vmem [shape: f32[1,128], index: 6, kind: input, shape index: {}]
  %s7 = inlined_call_operand.hbm [shape: f32[8,128], index: 7, kind: output, shape index: {}]
  %s8 = sld [smem:[#allocation0]]
  $region46: #{tpu_custom_call.1} parent=0
    _
  %s10 = ssub.s32 1, %s8
  %s11 = scalar_select 0, %s10, %s8
  $region1: #{tpu_custom_call.1} parent=0
    #allocation2 [shape = 'u8[163840]{0}', space=vmem, size = 0x28000, scoped, tag = 'input window, operand 2, single buffered']
    #allocation3 [shape = 's32[1]{0}', space=sflag, size = 0x4, scoped, tag = 'scoped memory for tpu_custom_call.1']
    #allocation4 [shape = 's32[1]{0}', space=sflag, size = 0x4, scoped, tag = 'scoped memory for tpu_custom_call.1']
    #allocation5 [shape = 'u8[8192]{0}', space=vmem, size = 0x2000, scoped, tag = 'input window, operand 4, single buffered']
    #allocation6 [shape = 's32[1]{0}', space=sflag, size = 0x4, scoped, tag = 'scoped memory for tpu_custom_call.1']
    #allocation7 [shape = 'u8[4096]{0}', space=vmem, size = 0x1000, scoped, tag = 'output window, operand 0, single buffered']
    %12 = vsyncpa [#allocation3], 0
    %13 = vsyncpa [#allocation6], 0
    %14 = vsyncpa [#allocation4], 0
    // Predicated region
    $region2: #{tpu_custom_call.1} parent=1 // pred_check
      _
    $region3: #{tpu_custom_call.1} parent=1 // pred_check_branch
      %16 = sbr.rel (0) target = $region5
    $region4: #{tpu_custom_call.1} parent=1 // pred_region
      _
    $region5: #{tpu_custom_call.1} parent=1 // pred_fallthru
      _
    // Predicated region
    $region6: #{tpu_custom_call.1} parent=1 // pred_check
      _
    $region7: #{tpu_custom_call.1} parent=1 // pred_check_branch
      %18 = sbr.rel (0) target = $region9
    $region8: #{tpu_custom_call.1} parent=1 // pred_region
      _
    $region9: #{tpu_custom_call.1} parent=1 // pred_fallthru
      _
    // Predicated region
    $region10: #{tpu_custom_call.1} parent=1 // pred_check
      _
    $region11: #{tpu_custom_call.1} parent=1 // pred_check_branch
      %20 = sbr.rel (0) target = $region13
    $region12: #{tpu_custom_call.1} parent=1 // pred_region
      %22 = vsyncadd [#allocation3], 0
      %s23 = sshll.u32 %s2, 4
      %s24 = int_to_ptr.hbm [resolvable:$true] %s23
      %s25 = sshll.u32 [#allocation2], 4
      %s26 = int_to_ptr.vmem [resolvable:$true] %s25
      %31 = dma.hbm_to_vmem [thread:$0]  %s24, 5120, %s26, [#allocation3], 64, 64, 4
    $region13: #{tpu_custom_call.1} parent=1 // pred_fallthru
      _
    // Predicated region
    $region14: #{tpu_custom_call.1} parent=1 // pred_check
      _
    $region15: #{tpu_custom_call.1} parent=1 // pred_check_branch
      %33 = sbr.rel (0) target = $region17
    $region16: #{tpu_custom_call.1} parent=1 // pred_region
      _
    $region17: #{tpu_custom_call.1} parent=1 // pred_fallthru
      _
    // Predicated region
    $region18: #{tpu_custom_call.1} parent=1 // pred_check
      _
    $region19: #{tpu_custom_call.1} parent=1 // pred_check_branch
      %35 = sbr.rel (0) target = $region21
    $region20: #{tpu_custom_call.1} parent=1 // pred_region
      %37 = vsyncadd [#allocation6], 0
      %s38 = sshll.u32 %s4, 4
      %s39 = int_to_ptr.hbm [resolvable:$true] %s38
      %s40 = sshll.u32 [#allocation5], 4
      %s41 = int_to_ptr.vmem [resolvable:$true] %s40
      %46 = dma.hbm_to_vmem [thread:$0]  %s39, 256, %s41, [#allocation6], 128, 128, 8
    $region21: #{tpu_custom_call.1} parent=1 // pred_fallthru
      _
    // Predicated region
    $region22: #{tpu_custom_call.1} parent=1 // pred_check
      _
    $region23: #{tpu_custom_call.1} parent=1 // pred_check_branch
      %48 = sbr.rel (0) target = $region25
    $region24: #{tpu_custom_call.1} parent=1 // pred_region
      _
    $region25: #{tpu_custom_call.1} parent=1 // pred_fallthru
      _
    // Predicated region
    $region26: #{tpu_custom_call.1} parent=1 // pred_check
      _
    $region27: #{tpu_custom_call.1} parent=1 // pred_check_branch
      %50 = sbr.rel (0) target = $region29
    $region28: #{tpu_custom_call.1} parent=1 // pred_region
      _
    $region29: #{tpu_custom_call.1} parent=1 // pred_fallthru
      _
    // Predicated region
    $region30: #{tpu_custom_call.1} parent=1 // pred_check
      _
    $region31: #{tpu_custom_call.1} parent=1 // pred_check_branch
      %52 = sbr.rel (0) target = $region33
    $region32: #{tpu_custom_call.1} parent=1 // pred_region
      %54 = dma.done [#allocation3], 5120
    $region33: #{tpu_custom_call.1} parent=1 // pred_fallthru
      _
    // Predicated region
    $region34: #{tpu_custom_call.1} parent=1 // pred_check
      _
    $region35: #{tpu_custom_call.1} parent=1 // pred_check_branch
      %56 = sbr.rel (0) target = $region37
    $region36: #{tpu_custom_call.1} parent=1 // pred_region
      %58 = dma.done [#allocation6], 256
    $region37: #{tpu_custom_call.1} parent=1 // pred_fallthru
      _
    %v59 = vlaneseq
    %v60 = vand.u32 %v59, 127
    %v61 = vld [vmem:[%s0] sm:$0xff]
    %v62 = vld [vmem:[%s0 + $0x8] sm:$0xff]
    %v63 = vld [vmem:[%s0 + $0x10] sm:$0xff]
    %v64 = vld [vmem:[%s0 + $0x18] sm:$0xff]
    %v65 = vld [vmem:[%s0 + $0x20] sm:$0xff]
    %v66 = vld [vmem:[%s0 + $0x28] sm:$0xff]
    %v67 = vld [vmem:[%s0 + $0x30] sm:$0xff]
    %v68 = vld [vmem:[%s0 + $0x38] sm:$0xff]
    %v69 = vld [vmem:[%s0 + $0x40] sm:$0xff]
    %v70 = vld [vmem:[%s0 + $0x48] sm:$0xff]
    %v71 = vld [vmem:[%s0 + $0x50] sm:$0xff]
    %v72 = vld [vmem:[%s0 + $0x58] sm:$0xff]
    %v73 = vld [vmem:[%s0 + $0x60] sm:$0xff]
    %v74 = vld [vmem:[%s0 + $0x68] sm:$0xff]
    %v75 = vld [vmem:[%s0 + $0x70] sm:$0xff]
    %v76 = vld [vmem:[%s0 + $0x78] sm:$0xff]
    %77 = vset.pattern.permute.xlu0 0
    %78 = vperm.xlu0 %77, %v61
    %v79 = vpop.permute.xlu0 %78
    %80 = vset.pattern.permute.xlu0 0
    %81 = vperm.xlu0 %80, %v62
    %v82 = vpop.permute.xlu0 %81
    %83 = vset.pattern.permute.xlu0 0
    %84 = vperm.xlu0 %83, %v63
    %v85 = vpop.permute.xlu0 %84
    %86 = vset.pattern.permute.xlu0 0
    %87 = vperm.xlu0 %86, %v64
    %v88 = vpop.permute.xlu0 %87
    %89 = vset.pattern.permute.xlu0 0
    %90 = vperm.xlu0 %89, %v65
    %v91 = vpop.permute.xlu0 %90
    %92 = vset.pattern.permute.xlu0 0
    %93 = vperm.xlu0 %92, %v66
    %v94 = vpop.permute.xlu0 %93
    %95 = vset.pattern.permute.xlu0 0
    %96 = vperm.xlu0 %95, %v67
    %v97 = vpop.permute.xlu0 %96
    %98 = vset.pattern.permute.xlu0 0
    %99 = vperm.xlu0 %98, %v68
    %v100 = vpop.permute.xlu0 %99
    %101 = vset.pattern.permute.xlu0 0
    %102 = vperm.xlu0 %101, %v69
    %v103 = vpop.permute.xlu0 %102
    %104 = vset.pattern.permute.xlu0 0
    %105 = vperm.xlu0 %104, %v70
    %v106 = vpop.permute.xlu0 %105
    %107 = vset.pattern.permute.xlu0 0
    %108 = vperm.xlu0 %107, %v71
    %v109 = vpop.permute.xlu0 %108
    %110 = vset.pattern.permute.xlu0 0
    %111 = vperm.xlu0 %110, %v72
    %v112 = vpop.permute.xlu0 %111
    %113 = vset.pattern.permute.xlu0 0
    %114 = vperm.xlu0 %113, %v73
    %v115 = vpop.permute.xlu0 %114
    %116 = vset.pattern.permute.xlu0 0
    %117 = vperm.xlu0 %116, %v74
    %v118 = vpop.permute.xlu0 %117
    %119 = vset.pattern.permute.xlu0 0
    %120 = vperm.xlu0 %119, %v75
    %v121 = vpop.permute.xlu0 %120
    %122 = vset.pattern.permute.xlu0 0
    %123 = vperm.xlu0 %122, %v76
    %v124 = vpop.permute.xlu0 %123
    %vm125 = vcmp.eq.s32.totalorder %v79, %v60
    %vm126 = vcmp.eq.s32.totalorder %v82, %v60
    %vm127 = vcmp.eq.s32.totalorder %v85, %v60
    %vm128 = vcmp.eq.s32.totalorder %v88, %v60
    %vm129 = vcmp.eq.s32.totalorder %v91, %v60
    %vm130 = vcmp.eq.s32.totalorder %v94, %v60
    %vm131 = vcmp.eq.s32.totalorder %v97, %v60
    %vm132 = vcmp.eq.s32.totalorder %v100, %v60
    %vm133 = vcmp.eq.s32.totalorder %v103, %v60
    %vm134 = vcmp.eq.s32.totalorder %v106, %v60
    %vm135 = vcmp.eq.s32.totalorder %v109, %v60
    %vm136 = vcmp.eq.s32.totalorder %v112, %v60
    %vm137 = vcmp.eq.s32.totalorder %v115, %v60
    %vm138 = vcmp.eq.s32.totalorder %v118, %v60
    %vm139 = vcmp.eq.s32.totalorder %v121, %v60
    %vm140 = vcmp.eq.s32.totalorder %v124, %v60
    %v141 = vsel %vm125, 1, 0
    %v142 = vsel %vm126, 1, 0
    %v143 = vsel %vm127, 1, 0
    %v144 = vsel %vm128, 1, 0
    %v145 = vsel %vm129, 1, 0
    %v146 = vsel %vm130, 1, 0
    %v147 = vsel %vm131, 1, 0
    %v148 = vsel %vm132, 1, 0
    %v149 = vsel %vm133, 1, 0
    %v150 = vsel %vm134, 1, 0
    %v151 = vsel %vm135, 1, 0
    %v152 = vsel %vm136, 1, 0
    %v153 = vsel %vm137, 1, 0
    %v154 = vsel %vm138, 1, 0
    %v155 = vsel %vm139, 1, 0
    %v156 = vsel %vm140, 1, 0
    %v157 = vcvt.s32.f32 %v141
    %v158 = vcvt.s32.f32 %v142
    %v159 = vcvt.s32.f32 %v143
    %v160 = vcvt.s32.f32 %v144
    %v161 = vcvt.s32.f32 %v145
    %v162 = vcvt.s32.f32 %v146
    %v163 = vcvt.s32.f32 %v147
    %v164 = vcvt.s32.f32 %v148
    %v165 = vcvt.s32.f32 %v149
    %v166 = vcvt.s32.f32 %v150
    %v167 = vcvt.s32.f32 %v151
    %v168 = vcvt.s32.f32 %v152
    %v169 = vcvt.s32.f32 %v153
    %v170 = vcvt.s32.f32 %v154
    %v171 = vcvt.s32.f32 %v155
    %v172 = vcvt.s32.f32 %v156
    %v173 = vpack.c.bf16 %v157, %v157
    %v174 = vpack.c.bf16 %v158, %v158
    %v175 = vpack.c.bf16 %v159, %v159
    %v176 = vpack.c.bf16 %v160, %v160
    %v177 = vpack.c.bf16 %v161, %v161
    %v178 = vpack.c.bf16 %v162, %v162
    %v179 = vpack.c.bf16 %v163, %v163
    %v180 = vpack.c.bf16 %v164, %v164
    %v181 = vpack.c.bf16 %v165, %v165
    %v182 = vpack.c.bf16 %v166, %v166
    %v183 = vpack.c.bf16 %v167, %v167
    %v184 = vpack.c.bf16 %v168, %v168
    %v185 = vpack.c.bf16 %v169, %v169
    %v186 = vpack.c.bf16 %v170, %v170
    %v187 = vpack.c.bf16 %v171, %v171
    %v188 = vpack.c.bf16 %v172, %v172
    %v189 = vld [vmem:[%s1] sm:$0xf]
    %v190 = vld [vmem:[%s1 + $0x4] sm:$0xf]
    %v191 = vld [vmem:[%s1 + $0x8] sm:$0xf]
    %v192 = vld [vmem:[%s1 + $0xc] sm:$0xf]
    %v193 = vld [vmem:[%s1 + $0x10] sm:$0xf]
    %v194 = vld [vmem:[%s1 + $0x14] sm:$0xf]
    %v195 = vld [vmem:[%s1 + $0x18] sm:$0xf]
    %v196 = vld [vmem:[%s1 + $0x1c] sm:$0xf]
    %v197 = vld [vmem:[%s1 + $0x20] sm:$0xf]
    %v198 = vld [vmem:[%s1 + $0x24] sm:$0xf]
    %v199 = vld [vmem:[%s1 + $0x28] sm:$0xf]
    %v200 = vld [vmem:[%s1 + $0x2c] sm:$0xf]
    %v201 = vld [vmem:[%s1 + $0x30] sm:$0xf]
    %v202 = vld [vmem:[%s1 + $0x34] sm:$0xf]
    %v203 = vld [vmem:[%s1 + $0x38] sm:$0xf]
    %v204 = vld [vmem:[%s1 + $0x3c] sm:$0xf]
    %v221 = vunpack.c.l.b16 %v173
    %v222 = vunpack.c.l.b16 %v174
    %v223 = vunpack.c.l.b16 %v175
    %v224 = vunpack.c.l.b16 %v176
    %v225 = vunpack.c.l.b16 %v177
    %v226 = vunpack.c.l.b16 %v178
    %v227 = vunpack.c.l.b16 %v179
    %v228 = vunpack.c.l.b16 %v180
    %v229 = vunpack.c.l.b16 %v181
    %v230 = vunpack.c.l.b16 %v182
    %v231 = vunpack.c.l.b16 %v183
    %v232 = vunpack.c.l.b16 %v184
    %v233 = vunpack.c.l.b16 %v185
    %v234 = vunpack.c.l.b16 %v186
    %v235 = vunpack.c.l.b16 %v187
    %v236 = vunpack.c.l.b16 %v188
    %v237 = vpack.c.b16 %v222, %v221
    %v238 = vpack.c.b16 %v224, %v223
    %v239 = vpack.c.b16 %v226, %v225
    %v240 = vpack.c.b16 %v228, %v227
    %v241 = vpack.c.b16 %v230, %v229
    %v242 = vpack.c.b16 %v232, %v231
    %v243 = vpack.c.b16 %v234, %v233
    %v244 = vpack.c.b16 %v236, %v235
    %v269 = vunpack.c.l.b16 %v189
    %v270 = vunpack.c.l.b16 %v190
    %v271 = vunpack.c.l.b16 %v191
    %v272 = vunpack.c.l.b16 %v192
    %v273 = vunpack.c.l.b16 %v193
    %v274 = vunpack.c.l.b16 %v194
    %v275 = vunpack.c.l.b16 %v195
    %v276 = vunpack.c.l.b16 %v196
    %v277 = vunpack.c.l.b16 %v197
    %v278 = vunpack.c.l.b16 %v198
    %v279 = vunpack.c.l.b16 %v199
    %v280 = vunpack.c.l.b16 %v200
    %v281 = vunpack.c.l.b16 %v201
    %v282 = vunpack.c.l.b16 %v202
    %v283 = vunpack.c.l.b16 %v203
    %v284 = vunpack.c.l.b16 %v204
    %v285 = vpack.c.b16 %v270, %v269
    %v286 = vpack.c.b16 %v272, %v271
    %v287 = vpack.c.b16 %v274, %v273
    %v288 = vpack.c.b16 %v276, %v275
    %v289 = vpack.c.b16 %v278, %v277
    %v290 = vpack.c.b16 %v280, %v279
    %v291 = vpack.c.b16 %v282, %v281
    %v292 = vpack.c.b16 %v284, %v283
    %301 = vmatpush.bf16.msra.mxu0 %v292
    %302 = vmatpush.bf16.msra.mxu0 %v291
    %303 = vmatpush.bf16.msra.mxu0 %v290
    %304 = vmatpush.bf16.msra.mxu0 %v289
    %305 = vmatpush.bf16.msra.mxu0 %v288
    %306 = vmatpush.bf16.msra.mxu0 %v287
    %307 = vmatpush.bf16.msra.mxu0 %v286
    %308 = vmatpush.bf16.msra.mxu0 %v285
    %309 = vmatmul.bf16.gmra.mxu0 %v237
    %v310 = vpop.f32.mrf.mxu0
    %v311 = vadd.f32 0.0, %v310
    %v312 = vpop.f32.mrf.mxu0
    %v313 = vadd.f32 0.0, %v312
    %314 = vmatmul.bf16.gmra.mxu0 %v238
    %v315 = vpop.f32.mrf.mxu0
    %v316 = vadd.f32 0.0, %v315
    %v317 = vpop.f32.mrf.mxu0
    %v318 = vadd.f32 0.0, %v317
    %319 = vmatmul.bf16.gmra.mxu0 %v239
    %v320 = vpop.f32.mrf.mxu0
    %v321 = vadd.f32 0.0, %v320
    %v322 = vpop.f32.mrf.mxu0
    %v323 = vadd.f32 0.0, %v322
    %324 = vmatmul.bf16.gmra.mxu0 %v240
    %v325 = vpop.f32.mrf.mxu0
    %v326 = vadd.f32 0.0, %v325
    %v327 = vpop.f32.mrf.mxu0
    %v328 = vadd.f32 0.0, %v327
    %329 = vmatmul.bf16.gmra.mxu0 %v241
    %v330 = vpop.f32.mrf.mxu0
    %v331 = vadd.f32 0.0, %v330
    %v332 = vpop.f32.mrf.mxu0
    %v333 = vadd.f32 0.0, %v332
    %334 = vmatmul.bf16.gmra.mxu0 %v242
    %v335 = vpop.f32.mrf.mxu0
    %v336 = vadd.f32 0.0, %v335
    %v337 = vpop.f32.mrf.mxu0
    %v338 = vadd.f32 0.0, %v337
    %339 = vmatmul.bf16.gmra.mxu0 %v243
    %v340 = vpop.f32.mrf.mxu0
    %v341 = vadd.f32 0.0, %v340
    %v342 = vpop.f32.mrf.mxu0
    %v343 = vadd.f32 0.0, %v342
    %344 = vmatmul.bf16.gmra.mxu0 %v244
    %v345 = vpop.f32.mrf.mxu0
    %v346 = vadd.f32 0.0, %v345
    %v347 = vpop.f32.mrf.mxu0
    %v348 = vadd.f32 0.0, %v347
    %349 = vdwg.mxu0
    %v350 = vpack.c.bf16 %v313, %v311
    %v351 = vpack.c.bf16 %v318, %v316
    %v352 = vpack.c.bf16 %v323, %v321
    %v353 = vpack.c.bf16 %v328, %v326
    %v354 = vpack.c.bf16 %v333, %v331
    %v355 = vpack.c.bf16 %v338, %v336
    %v356 = vpack.c.bf16 %v343, %v341
    %v357 = vpack.c.bf16 %v348, %v346
    %v358 = vld [vmem:[#allocation2] sm:$0xf]
    %v359 = vld [vmem:[#allocation2 + $0x4] sm:$0xf]
    %v360 = vld [vmem:[#allocation2 + $0x8] sm:$0xf]
    %v361 = vld [vmem:[#allocation2 + $0xc] sm:$0xf]
    %v362 = vld [vmem:[#allocation2 + $0x10] sm:$0xf]
    %v363 = vld [vmem:[#allocation2 + $0x14] sm:$0xf]
    %v364 = vld [vmem:[#allocation2 + $0x18] sm:$0xf]
    %v365 = vld [vmem:[#allocation2 + $0x1c] sm:$0xf]
    %v366 = vld [vmem:[#allocation2 + $0x20] sm:$0xf]
    %v367 = vld [vmem:[#allocation2 + $0x24] sm:$0xf]
    %v368 = vld [vmem:[#allocation2 + $0x28] sm:$0xf]
    %v369 = vld [vmem:[#allocation2 + $0x2c] sm:$0xf]
    %v370 = vld [vmem:[#allocation2 + $0x30] sm:$0xf]
    %v371 = vld [vmem:[#allocation2 + $0x34] sm:$0xf]
    %v372 = vld [vmem:[#allocation2 + $0x38] sm:$0xf]
    %v373 = vld [vmem:[#allocation2 + $0x3c] sm:$0xf]
    %v390 = vunpack.c.l.b16 %v358
    %v391 = vunpack.c.l.b16 %v359
    %v392 = vunpack.c.l.b16 %v360
    %v393 = vunpack.c.l.b16 %v361
    %v394 = vunpack.c.l.b16 %v362
    %v395 = vunpack.c.l.b16 %v363
    %v396 = vunpack.c.l.b16 %v364
    %v397 = vunpack.c.l.b16 %v365
    %v398 = vunpack.c.l.b16 %v366
    %v399 = vunpack.c.l.b16 %v367
    %v400 = vunpack.c.l.b16 %v368
    %v401 = vunpack.c.l.b16 %v369
    %v402 = vunpack.c.l.b16 %v370
    %v403 = vunpack.c.l.b16 %v371
    %v404 = vunpack.c.l.b16 %v372
    %v405 = vunpack.c.l.b16 %v373
    %v406 = vpack.c.b16 %v391, %v390
    %v407 = vpack.c.b16 %v393, %v392
    %v408 = vpack.c.b16 %v395, %v394
    %v409 = vpack.c.b16 %v397, %v396
    %v410 = vpack.c.b16 %v399, %v398
    %v411 = vpack.c.b16 %v401, %v400
    %v412 = vpack.c.b16 %v403, %v402
    %v413 = vpack.c.b16 %v405, %v404
    %422 = vmatpush.bf16.msra.mxu0 %v413
    %423 = vmatpush.bf16.msra.mxu0 %v412
    %424 = vmatpush.bf16.msra.mxu0 %v411
    %425 = vmatpush.bf16.msra.mxu0 %v410
    %426 = vmatpush.bf16.msra.mxu0 %v409
    %427 = vmatpush.bf16.msra.mxu0 %v408
    %428 = vmatpush.bf16.msra.mxu0 %v407
    %429 = vmatpush.bf16.msra.mxu0 %v406
    %430 = vmatmul.bf16.gmra.mxu0 %v350
    %v431 = vpop.f32.mrf.mxu0
    %v432 = vadd.f32 0.0, %v431
    %v433 = vpop.f32.mrf.mxu0
    %v434 = vadd.f32 0.0, %v433
    %435 = vmatmul.bf16.gmra.mxu0 %v351
    %v436 = vpop.f32.mrf.mxu0
    %v437 = vadd.f32 0.0, %v436
    %v438 = vpop.f32.mrf.mxu0
    %v439 = vadd.f32 0.0, %v438
    %440 = vmatmul.bf16.gmra.mxu0 %v352
    %v441 = vpop.f32.mrf.mxu0
    %v442 = vadd.f32 0.0, %v441
    %v443 = vpop.f32.mrf.mxu0
    %v444 = vadd.f32 0.0, %v443
    %445 = vmatmul.bf16.gmra.mxu0 %v353
    %v446 = vpop.f32.mrf.mxu0
    %v447 = vadd.f32 0.0, %v446
    %v448 = vpop.f32.mrf.mxu0
    %v449 = vadd.f32 0.0, %v448
    %450 = vmatmul.bf16.gmra.mxu0 %v354
    %v451 = vpop.f32.mrf.mxu0
    %v452 = vadd.f32 0.0, %v451
    %v453 = vpop.f32.mrf.mxu0
    %v454 = vadd.f32 0.0, %v453
    %455 = vmatmul.bf16.gmra.mxu0 %v355
    %v456 = vpop.f32.mrf.mxu0
    %v457 = vadd.f32 0.0, %v456
    %v458 = vpop.f32.mrf.mxu0
    %v459 = vadd.f32 0.0, %v458
    %460 = vmatmul.bf16.gmra.mxu0 %v356
    %v461 = vpop.f32.mrf.mxu0
    %v462 = vadd.f32 0.0, %v461
    %v463 = vpop.f32.mrf.mxu0
    %v464 = vadd.f32 0.0, %v463
    %465 = vmatmul.bf16.gmra.mxu0 %v357
    %v466 = vpop.f32.mrf.mxu0
    %v467 = vadd.f32 0.0, %v466
    %v468 = vpop.f32.mrf.mxu0
    %v469 = vadd.f32 0.0, %v468
    %470 = vdwg.mxu0
    %s471 = scalar_lea.vmem [#allocation2], 64
    %v472 = vld [vmem:[%s471] sm:$0xf]
    %v473 = vld [vmem:[%s471 + $0x4] sm:$0xf]
    %v474 = vld [vmem:[%s471 + $0x8] sm:$0xf]
    %v475 = vld [vmem:[%s471 + $0xc] sm:$0xf]
    %v476 = vld [vmem:[%s471 + $0x10] sm:$0xf]
    %v477 = vld [vmem:[%s471 + $0x14] sm:$0xf]
    %v478 = vld [vmem:[%s471 + $0x18] sm:$0xf]
    %v479 = vld [vmem:[%s471 + $0x1c] sm:$0xf]
    %v480 = vld [vmem:[%s471 + $0x20] sm:$0xf]
    %v481 = vld [vmem:[%s471 + $0x24] sm:$0xf]
    %v482 = vld [vmem:[%s471 + $0x28] sm:$0xf]
    %v483 = vld [vmem:[%s471 + $0x2c] sm:$0xf]
    %v484 = vld [vmem:[%s471 + $0x30] sm:$0xf]
    %v485 = vld [vmem:[%s471 + $0x34] sm:$0xf]
    %v486 = vld [vmem:[%s471 + $0x38] sm:$0xf]
    %v487 = vld [vmem:[%s471 + $0x3c] sm:$0xf]
    %v504 = vunpack.c.l.b16 %v472
    %v505 = vunpack.c.l.b16 %v473
    %v506 = vunpack.c.l.b16 %v474
    %v507 = vunpack.c.l.b16 %v475
    %v508 = vunpack.c.l.b16 %v476
    %v509 = vunpack.c.l.b16 %v477
    %v510 = vunpack.c.l.b16 %v478
    %v511 = vunpack.c.l.b16 %v479
    %v512 = vunpack.c.l.b16 %v480
    %v513 = vunpack.c.l.b16 %v481
    %v514 = vunpack.c.l.b16 %v482
    %v515 = vunpack.c.l.b16 %v483
    %v516 = vunpack.c.l.b16 %v484
    %v517 = vunpack.c.l.b16 %v485
    %v518 = vunpack.c.l.b16 %v486
    %v519 = vunpack.c.l.b16 %v487
    %v520 = vpack.c.b16 %v505, %v504
    %v521 = vpack.c.b16 %v507, %v506
    %v522 = vpack.c.b16 %v509, %v508
    %v523 = vpack.c.b16 %v511, %v510
    %v524 = vpack.c.b16 %v513, %v512
    %v525 = vpack.c.b16 %v515, %v514
    %v526 = vpack.c.b16 %v517, %v516
    %v527 = vpack.c.b16 %v519, %v518
    %536 = vmatpush.bf16.msra.mxu0 %v527
    %537 = vmatpush.bf16.msra.mxu0 %v526
    %538 = vmatpush.bf16.msra.mxu0 %v525
    %539 = vmatpush.bf16.msra.mxu0 %v524
    %540 = vmatpush.bf16.msra.mxu0 %v523
    %541 = vmatpush.bf16.msra.mxu0 %v522
    %542 = vmatpush.bf16.msra.mxu0 %v521
    %543 = vmatpush.bf16.msra.mxu0 %v520
    %544 = vmatmul.bf16.gmra.mxu0 %v350
    %v545 = vpop.f32.mrf.mxu0
    %v546 = vadd.f32 0.0, %v545
    %v547 = vpop.f32.mrf.mxu0
    %v548 = vadd.f32 0.0, %v547
    %549 = vmatmul.bf16.gmra.mxu0 %v351
    %v550 = vpop.f32.mrf.mxu0
    %v551 = vadd.f32 0.0, %v550
    %v552 = vpop.f32.mrf.mxu0
    %v553 = vadd.f32 0.0, %v552
    %554 = vmatmul.bf16.gmra.mxu0 %v352
    %v555 = vpop.f32.mrf.mxu0
    %v556 = vadd.f32 0.0, %v555
    %v557 = vpop.f32.mrf.mxu0
    %v558 = vadd.f32 0.0, %v557
    %559 = vmatmul.bf16.gmra.mxu0 %v353
    %v560 = vpop.f32.mrf.mxu0
    %v561 = vadd.f32 0.0, %v560
    %v562 = vpop.f32.mrf.mxu0
    %v563 = vadd.f32 0.0, %v562
    %564 = vmatmul.bf16.gmra.mxu0 %v354
    %v565 = vpop.f32.mrf.mxu0
    %v566 = vadd.f32 0.0, %v565
    %v567 = vpop.f32.mrf.mxu0
    %v568 = vadd.f32 0.0, %v567
    %569 = vmatmul.bf16.gmra.mxu0 %v355
    %v570 = vpop.f32.mrf.mxu0
    %v571 = vadd.f32 0.0, %v570
    %v572 = vpop.f32.mrf.mxu0
    %v573 = vadd.f32 0.0, %v572
    %574 = vmatmul.bf16.gmra.mxu0 %v356
    %v575 = vpop.f32.mrf.mxu0
    %v576 = vadd.f32 0.0, %v575
    %v577 = vpop.f32.mrf.mxu0
    %v578 = vadd.f32 0.0, %v577
    %579 = vmatmul.bf16.gmra.mxu0 %v357
    %v580 = vpop.f32.mrf.mxu0
    %v581 = vadd.f32 0.0, %v580
    %v582 = vpop.f32.mrf.mxu0
    %v583 = vadd.f32 0.0, %v582
    %584 = vdwg.mxu0
    %v585 = vrot.slane %v546, 1
    %v586 = vrot.slane %v551, 1
    %v587 = vrot.slane %v556, 1
    %v588 = vrot.slane %v561, 1
    %v589 = vrot.slane %v566, 1
    %v590 = vrot.slane %v571, 1
    %v591 = vrot.slane %v576, 1
    %v592 = vrot.slane %v581, 1
    %v593 = vrot.slane %v548, 1
    %v594 = vrot.slane %v553, 1
    %v595 = vrot.slane %v558, 1
    %v596 = vrot.slane %v563, 1
    %v597 = vrot.slane %v568, 1
    %v598 = vrot.slane %v573, 1
    %v599 = vrot.slane %v578, 1
    %v600 = vrot.slane %v583, 1
    %v601 = vlaneseq
    %v602 = vshrl.u32 %v601, 7
    %vm603 = vcmp.lt.s32.totalorder %v602, 7
    %v604 = vsel %vm603, %v585, %v593
    %v605 = vsel %vm603, %v586, %v594
    %v606 = vsel %vm603, %v587, %v595
    %v607 = vsel %vm603, %v588, %v596
    %v608 = vsel %vm603, %v589, %v597
    %v609 = vsel %vm603, %v590, %v598
    %v610 = vsel %vm603, %v591, %v599
    %v611 = vsel %vm603, %v592, %v600
    %v612 = vsel %vm603, %v593, %v585
    %v613 = vsel %vm603, %v594, %v586
    %v614 = vsel %vm603, %v595, %v587
    %v615 = vsel %vm603, %v596, %v588
    %v616 = vsel %vm603, %v597, %v589
    %v617 = vsel %vm603, %v598, %v590
    %v618 = vsel %vm603, %v599, %v591
    %v619 = vsel %vm603, %v600, %v592
    %v620 = vadd.f32 %v432, %v604
    %v621 = vadd.f32 %v434, %v612
    %v622 = vadd.f32 %v437, %v605
    %v623 = vadd.f32 %v439, %v613
    %v624 = vadd.f32 %v442, %v606
    %v625 = vadd.f32 %v444, %v614
    %v626 = vadd.f32 %v447, %v607
    %v627 = vadd.f32 %v449, %v615
    %v628 = vadd.f32 %v452, %v608
    %v629 = vadd.f32 %v454, %v616
    %v630 = vadd.f32 %v457, %v609
    %v631 = vadd.f32 %v459, %v617
    %v632 = vadd.f32 %v462, %v610
    %v633 = vadd.f32 %v464, %v618
    %v634 = vadd.f32 %v467, %v611
    %v635 = vadd.f32 %v469, %v619
    %s636 = scalar_lea.vmem [#allocation2], 128
    %v637 = vld [vmem:[%s636] sm:$0xf]
    %v638 = vld [vmem:[%s636 + $0x4] sm:$0xf]
    %v639 = vld [vmem:[%s636 + $0x8] sm:$0xf]
    %v640 = vld [vmem:[%s636 + $0xc] sm:$0xf]
    %v641 = vld [vmem:[%s636 + $0x10] sm:$0xf]
    %v642 = vld [vmem:[%s636 + $0x14] sm:$0xf]
    %v643 = vld [vmem:[%s636 + $0x18] sm:$0xf]
    %v644 = vld [vmem:[%s636 + $0x1c] sm:$0xf]
    %v645 = vld [vmem:[%s636 + $0x20] sm:$0xf]
    %v646 = vld [vmem:[%s636 + $0x24] sm:$0xf]
    %v647 = vld [vmem:[%s636 + $0x28] sm:$0xf]
    %v648 = vld [vmem:[%s636 + $0x2c] sm:$0xf]
    %v649 = vld [vmem:[%s636 + $0x30] sm:$0xf]
    %v650 = vld [vmem:[%s636 + $0x34] sm:$0xf]
    %v651 = vld [vmem:[%s636 + $0x38] sm:$0xf]
    %v652 = vld [vmem:[%s636 + $0x3c] sm:$0xf]
    %v669 = vunpack.c.l.b16 %v637
    %v670 = vunpack.c.l.b16 %v638
    %v671 = vunpack.c.l.b16 %v639
    %v672 = vunpack.c.l.b16 %v640
    %v673 = vunpack.c.l.b16 %v641
    %v674 = vunpack.c.l.b16 %v642
    %v675 = vunpack.c.l.b16 %v643
    %v676 = vunpack.c.l.b16 %v644
    %v677 = vunpack.c.l.b16 %v645
    %v678 = vunpack.c.l.b16 %v646
    %v679 = vunpack.c.l.b16 %v647
    %v680 = vunpack.c.l.b16 %v648
    %v681 = vunpack.c.l.b16 %v649
    %v682 = vunpack.c.l.b16 %v650
    %v683 = vunpack.c.l.b16 %v651
    %v684 = vunpack.c.l.b16 %v652
    %v685 = vpack.c.b16 %v670, %v669
    %v686 = vpack.c.b16 %v672, %v671
    %v687 = vpack.c.b16 %v674, %v673
    %v688 = vpack.c.b16 %v676, %v675
    %v689 = vpack.c.b16 %v678, %v677
    %v690 = vpack.c.b16 %v680, %v679
    %v691 = vpack.c.b16 %v682, %v681
    %v692 = vpack.c.b16 %v684, %v683
    %701 = vmatpush.bf16.msra.mxu0 %v692
    %702 = vmatpush.bf16.msra.mxu0 %v691
    %703 = vmatpush.bf16.msra.mxu0 %v690
    %704 = vmatpush.bf16.msra.mxu0 %v689
    %705 = vmatpush.bf16.msra.mxu0 %v688
    %706 = vmatpush.bf16.msra.mxu0 %v687
    %707 = vmatpush.bf16.msra.mxu0 %v686
    %708 = vmatpush.bf16.msra.mxu0 %v685
    %709 = vmatmul.bf16.gmra.mxu0 %v350
    %v710 = vpop.f32.mrf.mxu0
    %v711 = vadd.f32 0.0, %v710
    %v712 = vpop.f32.mrf.mxu0
    %v713 = vadd.f32 0.0, %v712
    %714 = vmatmul.bf16.gmra.mxu0 %v351
    %v715 = vpop.f32.mrf.mxu0
    %v716 = vadd.f32 0.0, %v715
    %v717 = vpop.f32.mrf.mxu0
    %v718 = vadd.f32 0.0, %v717
    %719 = vmatmul.bf16.gmra.mxu0 %v352
    %v720 = vpop.f32.mrf.mxu0
    %v721 = vadd.f32 0.0, %v720
    %v722 = vpop.f32.mrf.mxu0
    %v723 = vadd.f32 0.0, %v722
    %724 = vmatmul.bf16.gmra.mxu0 %v353
    %v725 = vpop.f32.mrf.mxu0
    %v726 = vadd.f32 0.0, %v725
    %v727 = vpop.f32.mrf.mxu0
    %v728 = vadd.f32 0.0, %v727
    %729 = vmatmul.bf16.gmra.mxu0 %v354
    %v730 = vpop.f32.mrf.mxu0
    %v731 = vadd.f32 0.0, %v730
    %v732 = vpop.f32.mrf.mxu0
    %v733 = vadd.f32 0.0, %v732
    %734 = vmatmul.bf16.gmra.mxu0 %v355
    %v735 = vpop.f32.mrf.mxu0
    %v736 = vadd.f32 0.0, %v735
    %v737 = vpop.f32.mrf.mxu0
    %v738 = vadd.f32 0.0, %v737
    %739 = vmatmul.bf16.gmra.mxu0 %v356
    %v740 = vpop.f32.mrf.mxu0
    %v741 = vadd.f32 0.0, %v740
    %v742 = vpop.f32.mrf.mxu0
    %v743 = vadd.f32 0.0, %v742
    %744 = vmatmul.bf16.gmra.mxu0 %v357
    %v745 = vpop.f32.mrf.mxu0
    %v746 = vadd.f32 0.0, %v745
    %v747 = vpop.f32.mrf.mxu0
    %v748 = vadd.f32 0.0, %v747
    %749 = vdwg.mxu0
    %v750 = vrot.slane %v711, 2
    %v751 = vrot.slane %v716, 2
    %v752 = vrot.slane %v721, 2
    %v753 = vrot.slane %v726, 2
    %v754 = vrot.slane %v731, 2
    %v755 = vrot.slane %v736, 2
    %v756 = vrot.slane %v741, 2
    %v757 = vrot.slane %v746, 2
    %v758 = vrot.slane %v713, 2
    %v759 = vrot.slane %v718, 2
    %v760 = vrot.slane %v723, 2
    %v761 = vrot.slane %v728, 2
    %v762 = vrot.slane %v733, 2
    %v763 = vrot.slane %v738, 2
    %v764 = vrot.slane %v743, 2
    %v765 = vrot.slane %v748, 2
    %vm766 = vcmp.lt.s32.totalorder %v602, 6
    %v767 = vsel %vm766, %v750, %v758
    %v768 = vsel %vm766, %v751, %v759
    %v769 = vsel %vm766, %v752, %v760
    %v770 = vsel %vm766, %v753, %v761
    %v771 = vsel %vm766, %v754, %v762
    %v772 = vsel %vm766, %v755, %v763
    %v773 = vsel %vm766, %v756, %v764
    %v774 = vsel %vm766, %v757, %v765
    %v775 = vsel %vm766, %v758, %v750
    %v776 = vsel %vm766, %v759, %v751
    %v777 = vsel %vm766, %v760, %v752
    %v778 = vsel %vm766, %v761, %v753
    %v779 = vsel %vm766, %v762, %v754
    %v780 = vsel %vm766, %v763, %v755
    %v781 = vsel %vm766, %v764, %v756
    %v782 = vsel %vm766, %v765, %v757
    %v783 = vadd.f32 %v620, %v767
    %v784 = vadd.f32 %v621, %v775
    %v785 = vadd.f32 %v622, %v768
    %v786 = vadd.f32 %v623, %v776
    %v787 = vadd.f32 %v624, %v769
    %v788 = vadd.f32 %v625, %v777
    %v789 = vadd.f32 %v626, %v770
    %v790 = vadd.f32 %v627, %v778
    %v791 = vadd.f32 %v628, %v771
    %v792 = vadd.f32 %v629, %v779
    %v793 = vadd.f32 %v630, %v772
    %v794 = vadd.f32 %v631, %v780
    %v795 = vadd.f32 %v632, %v773
    %v796 = vadd.f32 %v633, %v781
    %v797 = vadd.f32 %v634, %v774
    %v798 = vadd.f32 %v635, %v782
    %s799 = scalar_lea.vmem [#allocation2], 192
    %v800 = vld [vmem:[%s799] sm:$0xf]
    %v801 = vld [vmem:[%s799 + $0x4] sm:$0xf]
    %v802 = vld [vmem:[%s799 + $0x8] sm:$0xf]
    %v803 = vld [vmem:[%s799 + $0xc] sm:$0xf]
    %v804 = vld [vmem:[%s799 + $0x10] sm:$0xf]
    %v805 = vld [vmem:[%s799 + $0x14] sm:$0xf]
    %v806 = vld [vmem:[%s799 + $0x18] sm:$0xf]
    %v807 = vld [vmem:[%s799 + $0x1c] sm:$0xf]
    %v808 = vld [vmem:[%s799 + $0x20] sm:$0xf]
    %v809 = vld [vmem:[%s799 + $0x24] sm:$0xf]
    %v810 = vld [vmem:[%s799 + $0x28] sm:$0xf]
    %v811 = vld [vmem:[%s799 + $0x2c] sm:$0xf]
    %v812 = vld [vmem:[%s799 + $0x30] sm:$0xf]
    %v813 = vld [vmem:[%s799 + $0x34] sm:$0xf]
    %v814 = vld [vmem:[%s799 + $0x38] sm:$0xf]
    %v815 = vld [vmem:[%s799 + $0x3c] sm:$0xf]
    %v832 = vunpack.c.l.b16 %v800
    %v833 = vunpack.c.l.b16 %v801
    %v834 = vunpack.c.l.b16 %v802
    %v835 = vunpack.c.l.b16 %v803
    %v836 = vunpack.c.l.b16 %v804
    %v837 = vunpack.c.l.b16 %v805
    %v838 = vunpack.c.l.b16 %v806
    %v839 = vunpack.c.l.b16 %v807
    %v840 = vunpack.c.l.b16 %v808
    %v841 = vunpack.c.l.b16 %v809
    %v842 = vunpack.c.l.b16 %v810
    %v843 = vunpack.c.l.b16 %v811
    %v844 = vunpack.c.l.b16 %v812
    %v845 = vunpack.c.l.b16 %v813
    %v846 = vunpack.c.l.b16 %v814
    %v847 = vunpack.c.l.b16 %v815
    %v848 = vpack.c.b16 %v833, %v832
    %v849 = vpack.c.b16 %v835, %v834
    %v850 = vpack.c.b16 %v837, %v836
    %v851 = vpack.c.b16 %v839, %v838
    %v852 = vpack.c.b16 %v841, %v840
    %v853 = vpack.c.b16 %v843, %v842
    %v854 = vpack.c.b16 %v845, %v844
    %v855 = vpack.c.b16 %v847, %v846
    %864 = vmatpush.bf16.msra.mxu0 %v855
    %865 = vmatpush.bf16.msra.mxu0 %v854
    %866 = vmatpush.bf16.msra.mxu0 %v853
    %867 = vmatpush.bf16.msra.mxu0 %v852
    %868 = vmatpush.bf16.msra.mxu0 %v851
    %869 = vmatpush.bf16.msra.mxu0 %v850
    %870 = vmatpush.bf16.msra.mxu0 %v849
    %871 = vmatpush.bf16.msra.mxu0 %v848
    %872 = vmatmul.bf16.gmra.mxu0 %v350
    %v873 = vpop.f32.mrf.mxu0
    %v874 = vadd.f32 0.0, %v873
    %v875 = vpop.f32.mrf.mxu0
    %v876 = vadd.f32 0.0, %v875
    %877 = vmatmul.bf16.gmra.mxu0 %v351
    %v878 = vpop.f32.mrf.mxu0
    %v879 = vadd.f32 0.0, %v878
    %v880 = vpop.f32.mrf.mxu0
    %v881 = vadd.f32 0.0, %v880
    %882 = vmatmul.bf16.gmra.mxu0 %v352
    %v883 = vpop.f32.mrf.mxu0
    %v884 = vadd.f32 0.0, %v883
    %v885 = vpop.f32.mrf.mxu0
    %v886 = vadd.f32 0.0, %v885
    %887 = vmatmul.bf16.gmra.mxu0 %v353
    %v888 = vpop.f32.mrf.mxu0
    %v889 = vadd.f32 0.0, %v888
    %v890 = vpop.f32.mrf.mxu0
    %v891 = vadd.f32 0.0, %v890
    %892 = vmatmul.bf16.gmra.mxu0 %v354
    %v893 = vpop.f32.mrf.mxu0
    %v894 = vadd.f32 0.0, %v893
    %v895 = vpop.f32.mrf.mxu0
    %v896 = vadd.f32 0.0, %v895
    %897 = vmatmul.bf16.gmra.mxu0 %v355
    %v898 = vpop.f32.mrf.mxu0
    %v899 = vadd.f32 0.0, %v898
    %v900 = vpop.f32.mrf.mxu0
    %v901 = vadd.f32 0.0, %v900
    %902 = vmatmul.bf16.gmra.mxu0 %v356
    %v903 = vpop.f32.mrf.mxu0
    %v904 = vadd.f32 0.0, %v903
    %v905 = vpop.f32.mrf.mxu0
    %v906 = vadd.f32 0.0, %v905
    %907 = vmatmul.bf16.gmra.mxu0 %v357
    %v908 = vpop.f32.mrf.mxu0
    %v909 = vadd.f32 0.0, %v908
    %v910 = vpop.f32.mrf.mxu0
    %v911 = vadd.f32 0.0, %v910
    %912 = vdwg.mxu0
    %v913 = vrot.slane %v874, 3
    %v914 = vrot.slane %v879, 3
    %v915 = vrot.slane %v884, 3
    %v916 = vrot.slane %v889, 3
    %v917 = vrot.slane %v894, 3
    %v918 = vrot.slane %v899, 3
    %v919 = vrot.slane %v904, 3
    %v920 = vrot.slane %v909, 3
    %v921 = vrot.slane %v876, 3
    %v922 = vrot.slane %v881, 3
    %v923 = vrot.slane %v886, 3
    %v924 = vrot.slane %v891, 3
    %v925 = vrot.slane %v896, 3
    %v926 = vrot.slane %v901, 3
    %v927 = vrot.slane %v906, 3
    %v928 = vrot.slane %v911, 3
    %vm929 = vcmp.lt.s32.totalorder %v602, 5
    %v930 = vsel %vm929, %v913, %v921
    %v931 = vsel %vm929, %v914, %v922
    %v932 = vsel %vm929, %v915, %v923
    %v933 = vsel %vm929, %v916, %v924
    %v934 = vsel %vm929, %v917, %v925
    %v935 = vsel %vm929, %v918, %v926
    %v936 = vsel %vm929, %v919, %v927
    %v937 = vsel %vm929, %v920, %v928
    %v938 = vsel %vm929, %v921, %v913
    %v939 = vsel %vm929, %v922, %v914
    %v940 = vsel %vm929, %v923, %v915
    %v941 = vsel %vm929, %v924, %v916
    %v942 = vsel %vm929, %v925, %v917
    %v943 = vsel %vm929, %v926, %v918
    %v944 = vsel %vm929, %v927, %v919
    %v945 = vsel %vm929, %v928, %v920
    %v946 = vadd.f32 %v783, %v930
    %v947 = vadd.f32 %v784, %v938
    %v948 = vadd.f32 %v785, %v931
    %v949 = vadd.f32 %v786, %v939
    %v950 = vadd.f32 %v787, %v932
    %v951 = vadd.f32 %v788, %v940
    %v952 = vadd.f32 %v789, %v933
    %v953 = vadd.f32 %v790, %v941
    %v954 = vadd.f32 %v791, %v934
    %v955 = vadd.f32 %v792, %v942
    %v956 = vadd.f32 %v793, %v935
    %v957 = vadd.f32 %v794, %v943
    %v958 = vadd.f32 %v795, %v936
    %v959 = vadd.f32 %v796, %v944
    %v960 = vadd.f32 %v797, %v937
    %v961 = vadd.f32 %v798, %v945
    %s962 = scalar_lea.vmem [#allocation2], 256
    %v963 = vld [vmem:[%s962] sm:$0xf]
    %v964 = vld [vmem:[%s962 + $0x4] sm:$0xf]
    %v965 = vld [vmem:[%s962 + $0x8] sm:$0xf]
    %v966 = vld [vmem:[%s962 + $0xc] sm:$0xf]
    %v967 = vld [vmem:[%s962 + $0x10] sm:$0xf]
    %v968 = vld [vmem:[%s962 + $0x14] sm:$0xf]
    %v969 = vld [vmem:[%s962 + $0x18] sm:$0xf]
    %v970 = vld [vmem:[%s962 + $0x1c] sm:$0xf]
    %v971 = vld [vmem:[%s962 + $0x20] sm:$0xf]
    %v972 = vld [vmem:[%s962 + $0x24] sm:$0xf]
    %v973 = vld [vmem:[%s962 + $0x28] sm:$0xf]
    %v974 = vld [vmem:[%s962 + $0x2c] sm:$0xf]
    %v975 = vld [vmem:[%s962 + $0x30] sm:$0xf]
    %v976 = vld [vmem:[%s962 + $0x34] sm:$0xf]
    %v977 = vld [vmem:[%s962 + $0x38] sm:$0xf]
    %v978 = vld [vmem:[%s962 + $0x3c] sm:$0xf]
    %v995 = vunpack.c.l.b16 %v963
    %v996 = vunpack.c.l.b16 %v964
    %v997 = vunpack.c.l.b16 %v965
    %v998 = vunpack.c.l.b16 %v966
    %v999 = vunpack.c.l.b16 %v967
    %v1000 = vunpack.c.l.b16 %v968
    %v1001 = vunpack.c.l.b16 %v969
    %v1002 = vunpack.c.l.b16 %v970
    %v1003 = vunpack.c.l.b16 %v971
    %v1004 = vunpack.c.l.b16 %v972
    %v1005 = vunpack.c.l.b16 %v973
    %v1006 = vunpack.c.l.b16 %v974
    %v1007 = vunpack.c.l.b16 %v975
    %v1008 = vunpack.c.l.b16 %v976
    %v1009 = vunpack.c.l.b16 %v977
    %v1010 = vunpack.c.l.b16 %v978
    %v1011 = vpack.c.b16 %v996, %v995
    %v1012 = vpack.c.b16 %v998, %v997
    %v1013 = vpack.c.b16 %v1000, %v999
    %v1014 = vpack.c.b16 %v1002, %v1001
    %v1015 = vpack.c.b16 %v1004, %v1003
    %v1016 = vpack.c.b16 %v1006, %v1005
    %v1017 = vpack.c.b16 %v1008, %v1007
    %v1018 = vpack.c.b16 %v1010, %v1009
    %1027 = vmatpush.bf16.msra.mxu0 %v1018
    %1028 = vmatpush.bf16.msra.mxu0 %v1017
    %1029 = vmatpush.bf16.msra.mxu0 %v1016
    %1030 = vmatpush.bf16.msra.mxu0 %v1015
    %1031 = vmatpush.bf16.msra.mxu0 %v1014
    %1032 = vmatpush.bf16.msra.mxu0 %v1013
    %1033 = vmatpush.bf16.msra.mxu0 %v1012
    %1034 = vmatpush.bf16.msra.mxu0 %v1011
    %1035 = vmatmul.bf16.gmra.mxu0 %v350
    %v1036 = vpop.f32.mrf.mxu0
    %v1037 = vadd.f32 0.0, %v1036
    %v1038 = vpop.f32.mrf.mxu0
    %v1039 = vadd.f32 0.0, %v1038
    %1040 = vmatmul.bf16.gmra.mxu0 %v351
    %v1041 = vpop.f32.mrf.mxu0
    %v1042 = vadd.f32 0.0, %v1041
    %v1043 = vpop.f32.mrf.mxu0
    %v1044 = vadd.f32 0.0, %v1043
    %1045 = vmatmul.bf16.gmra.mxu0 %v352
    %v1046 = vpop.f32.mrf.mxu0
    %v1047 = vadd.f32 0.0, %v1046
    %v1048 = vpop.f32.mrf.mxu0
    %v1049 = vadd.f32 0.0, %v1048
    %1050 = vmatmul.bf16.gmra.mxu0 %v353
    %v1051 = vpop.f32.mrf.mxu0
    %v1052 = vadd.f32 0.0, %v1051
    %v1053 = vpop.f32.mrf.mxu0
    %v1054 = vadd.f32 0.0, %v1053
    %1055 = vmatmul.bf16.gmra.mxu0 %v354
    %v1056 = vpop.f32.mrf.mxu0
    %v1057 = vadd.f32 0.0, %v1056
    %v1058 = vpop.f32.mrf.mxu0
    %v1059 = vadd.f32 0.0, %v1058
    %1060 = vmatmul.bf16.gmra.mxu0 %v355
    %v1061 = vpop.f32.mrf.mxu0
    %v1062 = vadd.f32 0.0, %v1061
    %v1063 = vpop.f32.mrf.mxu0
    %v1064 = vadd.f32 0.0, %v1063
    %1065 = vmatmul.bf16.gmra.mxu0 %v356
    %v1066 = vpop.f32.mrf.mxu0
    %v1067 = vadd.f32 0.0, %v1066
    %v1068 = vpop.f32.mrf.mxu0
    %v1069 = vadd.f32 0.0, %v1068
    %1070 = vmatmul.bf16.gmra.mxu0 %v357
    %v1071 = vpop.f32.mrf.mxu0
    %v1072 = vadd.f32 0.0, %v1071
    %v1073 = vpop.f32.mrf.mxu0
    %v1074 = vadd.f32 0.0, %v1073
    %1075 = vdwg.mxu0
    %v1076 = vrot.slane %v1037, 4
    %v1077 = vrot.slane %v1042, 4
    %v1078 = vrot.slane %v1047, 4
    %v1079 = vrot.slane %v1052, 4
    %v1080 = vrot.slane %v1057, 4
    %v1081 = vrot.slane %v1062, 4
    %v1082 = vrot.slane %v1067, 4
    %v1083 = vrot.slane %v1072, 4
    %v1084 = vrot.slane %v1039, 4
    %v1085 = vrot.slane %v1044, 4
    %v1086 = vrot.slane %v1049, 4
    %v1087 = vrot.slane %v1054, 4
    %v1088 = vrot.slane %v1059, 4
    %v1089 = vrot.slane %v1064, 4
    %v1090 = vrot.slane %v1069, 4
    %v1091 = vrot.slane %v1074, 4
    %vm1092 = vcmp.lt.s32.totalorder %v602, 4
    %v1093 = vsel %vm1092, %v1076, %v1084
    %v1094 = vsel %vm1092, %v1077, %v1085
    %v1095 = vsel %vm1092, %v1078, %v1086
    %v1096 = vsel %vm1092, %v1079, %v1087
    %v1097 = vsel %vm1092, %v1080, %v1088
    %v1098 = vsel %vm1092, %v1081, %v1089
    %v1099 = vsel %vm1092, %v1082, %v1090
    %v1100 = vsel %vm1092, %v1083, %v1091
    %v1101 = vsel %vm1092, %v1084, %v1076
    %v1102 = vsel %vm1092, %v1085, %v1077
    %v1103 = vsel %vm1092, %v1086, %v1078
    %v1104 = vsel %vm1092, %v1087, %v1079
    %v1105 = vsel %vm1092, %v1088, %v1080
    %v1106 = vsel %vm1092, %v1089, %v1081
    %v1107 = vsel %vm1092, %v1090, %v1082
    %v1108 = vsel %vm1092, %v1091, %v1083
    %v1109 = vadd.f32 %v946, %v1093
    %v1110 = vadd.f32 %v947, %v1101
    %v1111 = vadd.f32 %v948, %v1094
    %v1112 = vadd.f32 %v949, %v1102
    %v1113 = vadd.f32 %v950, %v1095
    %v1114 = vadd.f32 %v951, %v1103
    %v1115 = vadd.f32 %v952, %v1096
    %v1116 = vadd.f32 %v953, %v1104
    %v1117 = vadd.f32 %v954, %v1097
    %v1118 = vadd.f32 %v955, %v1105
    %v1119 = vadd.f32 %v956, %v1098
    %v1120 = vadd.f32 %v957, %v1106
    %v1121 = vadd.f32 %v958, %v1099
    %v1122 = vadd.f32 %v959, %v1107
    %v1123 = vadd.f32 %v960, %v1100
    %v1124 = vadd.f32 %v961, %v1108
    %v1125 = vld [vmem:[#allocation5 + $0x8] sm:$0xff]
    %v1126 = vrot.slane %v1109, 4
    %v1127 = vmax.f32 %v1109, %v1126
    %v1128 = vrot.slane %v1127, 2
    %v1129 = vmax.f32 %v1127, %v1128
    %v1130 = vrot.slane %v1129, 1
    %v1131 = vmax.f32 %v1129, %v1130
    %v1132 = vrot.slane %v1111, 4
    %v1133 = vmax.f32 %v1111, %v1132
    %v1134 = vrot.slane %v1133, 2
    %v1135 = vmax.f32 %v1133, %v1134
    %v1136 = vrot.slane %v1135, 1
    %v1137 = vmax.f32 %v1135, %v1136
    %v1138 = vrot.slane %v1113, 4
    %v1139 = vmax.f32 %v1113, %v1138
    %v1140 = vrot.slane %v1139, 2
    %v1141 = vmax.f32 %v1139, %v1140
    %v1142 = vrot.slane %v1141, 1
    %v1143 = vmax.f32 %v1141, %v1142
    %v1144 = vrot.slane %v1115, 4
    %v1145 = vmax.f32 %v1115, %v1144
    %v1146 = vrot.slane %v1145, 2
    %v1147 = vmax.f32 %v1145, %v1146
    %v1148 = vrot.slane %v1147, 1
    %v1149 = vmax.f32 %v1147, %v1148
    %v1150 = vrot.slane %v1117, 4
    %v1151 = vmax.f32 %v1117, %v1150
    %v1152 = vrot.slane %v1151, 2
    %v1153 = vmax.f32 %v1151, %v1152
    %v1154 = vrot.slane %v1153, 1
    %v1155 = vmax.f32 %v1153, %v1154
    %v1156 = vrot.slane %v1119, 4
    %v1157 = vmax.f32 %v1119, %v1156
    %v1158 = vrot.slane %v1157, 2
    %v1159 = vmax.f32 %v1157, %v1158
    %v1160 = vrot.slane %v1159, 1
    %v1161 = vmax.f32 %v1159, %v1160
    %v1162 = vrot.slane %v1121, 4
    %v1163 = vmax.f32 %v1121, %v1162
    %v1164 = vrot.slane %v1163, 2
    %v1165 = vmax.f32 %v1163, %v1164
    %v1166 = vrot.slane %v1165, 1
    %v1167 = vmax.f32 %v1165, %v1166
    %v1168 = vrot.slane %v1123, 4
    %v1169 = vmax.f32 %v1123, %v1168
    %v1170 = vrot.slane %v1169, 2
    %v1171 = vmax.f32 %v1169, %v1170
    %v1172 = vrot.slane %v1171, 1
    %v1173 = vmax.f32 %v1171, %v1172
    %vm1174 = vcmp.gt.f32.partialorder %v1125, 0.5
    %v1175 = vsel %vm1174, 1, 0
    %vm1176 = vcmp.eq.s32.totalorder %v1175, 1
    %v1177 = vsel %vm1176, %v1110, -1e+30
    %v1178 = vsel %vm1176, %v1112, -1e+30
    %v1179 = vsel %vm1176, %v1114, -1e+30
    %v1180 = vsel %vm1176, %v1116, -1e+30
    %v1181 = vsel %vm1176, %v1118, -1e+30
    %v1182 = vsel %vm1176, %v1120, -1e+30
    %v1183 = vsel %vm1176, %v1122, -1e+30
    %v1184 = vsel %vm1176, %v1124, -1e+30
    %v1185 = vrot.slane %v1177, 4
    %v1186 = vmax.f32 %v1177, %v1185
    %v1187 = vrot.slane %v1186, 2
    %v1188 = vmax.f32 %v1186, %v1187
    %v1189 = vrot.slane %v1188, 1
    %v1190 = vmax.f32 %v1188, %v1189
    %v1191 = vrot.slane %v1178, 4
    %v1192 = vmax.f32 %v1178, %v1191
    %v1193 = vrot.slane %v1192, 2
    %v1194 = vmax.f32 %v1192, %v1193
    %v1195 = vrot.slane %v1194, 1
    %v1196 = vmax.f32 %v1194, %v1195
    %v1197 = vrot.slane %v1179, 4
    %v1198 = vmax.f32 %v1179, %v1197
    %v1199 = vrot.slane %v1198, 2
    %v1200 = vmax.f32 %v1198, %v1199
    %v1201 = vrot.slane %v1200, 1
    %v1202 = vmax.f32 %v1200, %v1201
    %v1203 = vrot.slane %v1180, 4
    %v1204 = vmax.f32 %v1180, %v1203
    %v1205 = vrot.slane %v1204, 2
    %v1206 = vmax.f32 %v1204, %v1205
    %v1207 = vrot.slane %v1206, 1
    %v1208 = vmax.f32 %v1206, %v1207
    %v1209 = vrot.slane %v1181, 4
    %v1210 = vmax.f32 %v1181, %v1209
    %v1211 = vrot.slane %v1210, 2
    %v1212 = vmax.f32 %v1210, %v1211
    %v1213 = vrot.slane %v1212, 1
    %v1214 = vmax.f32 %v1212, %v1213
    %v1215 = vrot.slane %v1182, 4
    %v1216 = vmax.f32 %v1182, %v1215
    %v1217 = vrot.slane %v1216, 2
    %v1218 = vmax.f32 %v1216, %v1217
    %v1219 = vrot.slane %v1218, 1
    %v1220 = vmax.f32 %v1218, %v1219
    %v1221 = vrot.slane %v1183, 4
    %v1222 = vmax.f32 %v1183, %v1221
    %v1223 = vrot.slane %v1222, 2
    %v1224 = vmax.f32 %v1222, %v1223
    %v1225 = vrot.slane %v1224, 1
    %v1226 = vmax.f32 %v1224, %v1225
    %v1227 = vrot.slane %v1184, 4
    %v1228 = vmax.f32 %v1184, %v1227
    %v1229 = vrot.slane %v1228, 2
    %v1230 = vmax.f32 %v1228, %v1229
    %v1231 = vrot.slane %v1230, 1
    %v1232 = vmax.f32 %v1230, %v1231
    %v1233 = vmax.f32 %v1131, %v1190
    %v1234 = vmax.f32 %v1137, %v1196
    %v1235 = vmax.f32 %v1143, %v1202
    %v1236 = vmax.f32 %v1149, %v1208
    %v1237 = vmax.f32 %v1155, %v1214
    %v1238 = vmax.f32 %v1161, %v1220
    %v1239 = vmax.f32 %v1167, %v1226
    %v1240 = vmax.f32 %v1173, %v1232
    %v1241 = vld [vmem:[%s3] sm:$0x1]
    %v1243 = vperm.slane %v1241, 0
    %v1245 = vadd.f32 %v1233, %v1243
    %v1246 = vadd.f32 %v1234, %v1243
    %v1247 = vadd.f32 %v1235, %v1243
    %v1248 = vadd.f32 %v1236, %v1243
    %v1249 = vadd.f32 %v1237, %v1243
    %v1250 = vadd.f32 %v1238, %v1243
    %v1251 = vadd.f32 %v1239, %v1243
    %v1252 = vadd.f32 %v1240, %v1243
    %v1253 = vmax.f32 %v1245, 0.0
    %v1254 = vmax.f32 %v1246, 0.0
    %v1255 = vmax.f32 %v1247, 0.0
    %v1256 = vmax.f32 %v1248, 0.0
    %v1257 = vmax.f32 %v1249, 0.0
    %v1258 = vmax.f32 %v1250, 0.0
    %v1259 = vmax.f32 %v1251, 0.0
    %v1260 = vmax.f32 %v1252, 0.0
    %v1261 = vpack.c.bf16 %v1253, %v1253
    %v1262 = vpack.c.bf16 %v1254, %v1254
    %v1263 = vpack.c.bf16 %v1255, %v1255
    %v1264 = vpack.c.bf16 %v1256, %v1256
    %v1265 = vpack.c.bf16 %v1257, %v1257
    %v1266 = vpack.c.bf16 %v1258, %v1258
    %v1267 = vpack.c.bf16 %v1259, %v1259
    %v1268 = vpack.c.bf16 %v1260, %v1260
    %v1269 = vld [vmem:[%s5] sm:$0xf]
    %v1270 = vld [vmem:[%s5 + $0x4] sm:$0xf]
    %v1271 = vld [vmem:[%s5 + $0x8] sm:$0xf]
    %v1272 = vld [vmem:[%s5 + $0xc] sm:$0xf]
    %v1273 = vld [vmem:[%s5 + $0x10] sm:$0xf]
    %v1274 = vld [vmem:[%s5 + $0x14] sm:$0xf]
    %v1275 = vld [vmem:[%s5 + $0x18] sm:$0xf]
    %v1276 = vld [vmem:[%s5 + $0x1c] sm:$0xf]
    %v1277 = vld [vmem:[%s5 + $0x20] sm:$0xf]
    %v1278 = vld [vmem:[%s5 + $0x24] sm:$0xf]
    %v1279 = vld [vmem:[%s5 + $0x28] sm:$0xf]
    %v1280 = vld [vmem:[%s5 + $0x2c] sm:$0xf]
    %v1281 = vld [vmem:[%s5 + $0x30] sm:$0xf]
    %v1282 = vld [vmem:[%s5 + $0x34] sm:$0xf]
    %v1283 = vld [vmem:[%s5 + $0x38] sm:$0xf]
    %v1284 = vld [vmem:[%s5 + $0x3c] sm:$0xf]
    %v1285 = vld [vmem:[%s6] sm:$0x1]
    %v1287 = vperm.slane %v1285, 0
    %v1297 = vunpack.c.l.b16 %v1261
    %v1298 = vunpack.c.l.b16 %v1262
    %v1299 = vunpack.c.l.b16 %v1263
    %v1300 = vunpack.c.l.b16 %v1264
    %v1301 = vunpack.c.l.b16 %v1265
    %v1302 = vunpack.c.l.b16 %v1266
    %v1303 = vunpack.c.l.b16 %v1267
    %v1304 = vunpack.c.l.b16 %v1268
    %v1305 = vrot.slane %v1298, 7
    %vm1306 = vcmask 1041409
    %v1307 = vsel %vm1306, %v1305, %v1297
    %v1308 = vrot.slane %v1299, 6
    %vm1309 = vcmask 1042434
    %v1310 = vsel %vm1309, %v1308, %v1307
    %v1311 = vrot.slane %v1300, 5
    %vm1312 = vcmask 1043459
    %v1313 = vsel %vm1312, %v1311, %v1310
    %v1314 = vrot.slane %v1301, 4
    %vm1315 = vcmask 1044484
    %v1316 = vsel %vm1315, %v1314, %v1313
    %v1317 = vrot.slane %v1302, 3
    %vm1318 = vcmask 1045509
    %v1319 = vsel %vm1318, %v1317, %v1316
    %v1320 = vrot.slane %v1303, 2
    %vm1321 = vcmask 1046534
    %v1322 = vsel %vm1321, %v1320, %v1319
    %v1323 = vrot.slane %v1304, 1
    %vm1324 = vcmask 1047559
    %v1325 = vsel %vm1324, %v1323, %v1322
    %v1326 = vpack.c.b16 %v1325, %v1325
    %v1344 = vunpack.c.l.b16 %v1269
    %v1345 = vunpack.c.l.b16 %v1270
    %v1346 = vunpack.c.l.b16 %v1271
    %v1347 = vunpack.c.l.b16 %v1272
    %v1348 = vunpack.c.l.b16 %v1273
    %v1349 = vunpack.c.l.b16 %v1274
    %v1350 = vunpack.c.l.b16 %v1275
    %v1351 = vunpack.c.l.b16 %v1276
    %v1352 = vunpack.c.l.b16 %v1277
    %v1353 = vunpack.c.l.b16 %v1278
    %v1354 = vunpack.c.l.b16 %v1279
    %v1355 = vunpack.c.l.b16 %v1280
    %v1356 = vunpack.c.l.b16 %v1281
    %v1357 = vunpack.c.l.b16 %v1282
    %v1358 = vunpack.c.l.b16 %v1283
    %v1359 = vunpack.c.l.b16 %v1284
    %v1360 = vpack.c.b16 %v1345, %v1344
    %v1361 = vpack.c.b16 %v1347, %v1346
    %v1362 = vpack.c.b16 %v1349, %v1348
    %v1363 = vpack.c.b16 %v1351, %v1350
    %v1364 = vpack.c.b16 %v1353, %v1352
    %v1365 = vpack.c.b16 %v1355, %v1354
    %v1366 = vpack.c.b16 %v1357, %v1356
    %v1367 = vpack.c.b16 %v1359, %v1358
    %1376 = vmatpush.bf16.msra.mxu0 %v1367
    %1377 = vmatpush.bf16.msra.mxu0 %v1366
    %1378 = vmatpush.bf16.msra.mxu0 %v1365
    %1379 = vmatpush.bf16.msra.mxu0 %v1364
    %1380 = vmatpush.bf16.msra.mxu0 %v1363
    %1381 = vmatpush.bf16.msra.mxu0 %v1362
    %1382 = vmatpush.bf16.msra.mxu0 %v1361
    %1383 = vmatpush.bf16.msra.mxu0 %v1360
    %1384 = vmatmul.bf16.gmra.mxu0 %v1326
    %v1385 = vpop.f32.mrf.mxu0
    %v1386 = vadd.f32 %v1287, %v1385
    %v1387 = vpop.f32.mrf.mxu0
    %1388 = vdwg.mxu0
    %1389 = vst [vmem:[#allocation7] sm:$0xff] %v1386
    // Predicated region
    $region38: #{tpu_custom_call.1} parent=1 // pred_check
      _
    $region39: #{tpu_custom_call.1} parent=1 // pred_check_branch
      %1391 = sbr.rel (0) target = $region41
    $region40: #{tpu_custom_call.1} parent=1 // pred_region
      %1393 = vsyncadd [#allocation4], 0
      %s1395 = sshll.u32 [#allocation7], 4
      %s1396 = int_to_ptr.vmem [resolvable:$true] %s1395
      %s1397 = sshll.u32 %s7, 4
      %s1398 = int_to_ptr.hbm [resolvable:$true] %s1397
      %1400 = dma.vmem_to_hbm [thread:$0]  %s1396, 128, %s1398, [#allocation4]
    $region41: #{tpu_custom_call.1} parent=1 // pred_fallthru
      _
    // Predicated region
    $region42: #{tpu_custom_call.1} parent=1 // pred_check
      _
    $region43: #{tpu_custom_call.1} parent=1 // pred_check_branch
      %1402 = sbr.rel (0) target = $region45
    $region44: #{tpu_custom_call.1} parent=1 // pred_region
      %1404 = dma.done [#allocation4], 128
    $region45: #{tpu_custom_call.1} parent=1 // pred_fallthru
      _
    %1405 = vsyncpa [#allocation3], 1
    %1406 = vsyncpa [#allocation6], 1
    %1407 = vsyncpa [#allocation4], 1

</llo_original>
